<compile_context>
chip_gen: v5e
topology: v5e:2x2
jax: 0.10.0
libtpu: 0.0.40
codegen_flags: <defaults>
</compile_context>

<pallas_src>
import functools

import jax
import jax.numpy as jnp
from jax.experimental import pallas as pl
from jax.experimental.pallas import tpu as pltpu

IN_DIMS = 44
LAYER_DIMS = [IN_DIMS, 64, 128, 180, 150, 105, 64, 32, 2]   # 8 linear layers
NUM_LAYERS = len(LAYER_DIMS) - 1                             # 8
NUM_CLASSES = LAYER_DIMS[-1]                                 # 2


def _rup(n, m):
    return ((n + m - 1) // m) * m


# Per-layer lane-dense padded widths (multiples of 128).
PAD_DIMS = [_rup(d, 128) for d in LAYER_DIMS]   # [128,128,128,256,256,128,128,128,128]
K_PADS = PAD_DIMS[:-1]                          # padded fan-in  per layer
N_PADS = PAD_DIMS[1:]                           # padded fan-out per layer
MAX_PAD = max(PAD_DIMS)                         # 256 (packed-cube width)
OUT_PAD = N_PADS[-1]                            # 128 (padded logits width)


def _mlp_kernel(x_ref, w_ref, b_ref, out_ref, xpad_ref):
    """One batch tile through all 8 layers.

    x_ref   : [TM, 44]            f32  (raw features, streamed)
    w_ref   : [8, 256, 256]       bf16 (zero-padded weights, [in, out] per layer)
    b_ref   : [8, 256]            f32  (zero-padded biases)
    out_ref : [TM, OUT_PAD]       f32  (padded logits; lanes >= 2 are zero)
    xpad_ref: [TM, K_PADS[0]]     bf16 (scratch: lane-padded first activation)
    """
    # Zero-pad the 44 real feature lanes up to 128 inside VMEM (no wrapper pad
    # pass).  Zero the whole scratch each step so the padded lanes are always
    # valid regardless of how the grid is sharded across cores.
    xpad_ref[...] = jnp.zeros_like(xpad_ref)
    xpad_ref[:, :IN_DIMS] = x_ref[...].astype(jnp.bfloat16)
    h = xpad_ref[...]                                            # [TM, 128] bf16

    # Statically unrolled layer loop.  Each matmul/bias/ReLU runs at the
    # layer's minimal padded width; the packed cube is sliced at the ref so
    # only the needed [kp, np] tile is loaded from VMEM.
    for l in range(NUM_LAYERS):
        kp, np_ = K_PADS[l], N_PADS[l]
        y = jnp.dot(h, w_ref[l, :kp, :np_],
                    preferred_element_type=jnp.float32)          # MXU, f32 acc
        y = y + b_ref[l:l + 1, :np_]                             # [1, np_] bcast
        if l < NUM_LAYERS - 1:
            h = jnp.maximum(y, 0.0).astype(jnp.bfloat16)
        else:
            out_ref[...] = y                                     # logits (f32)


def init_params(key, dims=LAYER_DIMS):
    """PyTorch nn.Linear default init: U(-1/sqrt(fan_in), +1/sqrt(fan_in)).
    Weights stored transposed ([in, out]) so each layer is y = x @ W + b."""
    params = []
    for i in range(len(dims) - 1):
        fan_in, fan_out = dims[i], dims[i + 1]
        key, kw, kb = jax.random.split(key, 3)
        bound = 1.0 / float(fan_in) ** 0.5
        w = jax.random.uniform(kw, (fan_in, fan_out), jnp.float32, -bound, bound)
        b = jax.random.uniform(kb, (fan_out,), jnp.float32, -bound, bound)
        params.append((w, b))
    return params


def pack_params(params):
    """Pack all layers into one zero-padded bf16 weight cube + one f32 bias matrix."""
    w_packed = jnp.zeros((NUM_LAYERS, MAX_PAD, MAX_PAD), jnp.bfloat16)
    b_packed = jnp.zeros((NUM_LAYERS, MAX_PAD), jnp.float32)
    for l, (w, b) in enumerate(params):
        w_packed = w_packed.at[l, :w.shape[0], :w.shape[1]].set(w.astype(jnp.bfloat16))
        b_packed = b_packed.at[l, :b.shape[0]].set(b.astype(jnp.float32))
    return w_packed, b_packed


@functools.partial(jax.jit, static_argnames=("tm",))
def meta_classifier_forward(x, w_packed, b_packed, tm=1024):
    """x: [B, IN_DIMS] f32 -> logits [B, NUM_CLASSES] f32."""
    B = x.shape[0]
    b_rounded = _rup(B, 8)

    # Batch tile (multiple of 8 sublanes).  Cap at ~half the batch so the grid
    # has >= 2 steps whenever B >= 16 -> "parallel" axis shards across the two
    # TensorCores on v7x (no effect on single-TC v5e/v6e).
    if b_rounded >= 16:
        tm_cap = _rup((b_rounded + 1) // 2, 8)
    else:
        tm_cap = b_rounded
    tm = max(8, min(tm, tm_cap))
    grid = (pl.cdiv(B, tm),)           # ragged last tile handled by Pallas

    # VMEM footprint estimate; only set an explicit limit if tiles get huge
    # (matters only for very large tm on v7x's 64 MiB / 32 MiB-scoped VMEM).
    est_bytes = (
        2 * NUM_LAYERS * MAX_PAD * MAX_PAD * 2    # weight cube, double-buffered
        + 2 * NUM_LAYERS * MAX_PAD * 4            # biases, double-buffered
        + 2 * tm * IN_DIMS * 4                    # x tiles, double-buffered
        + 2 * tm * OUT_PAD * 4                    # out tiles, double-buffered
        + tm * K_PADS[0] * 2                      # xpad scratch
        + (4 << 20)                               # headroom
    )
    vmem_limit = est_bytes if est_bytes > (24 << 20) else None

    out_padded = pl.pallas_call(
        _mlp_kernel,
        out_shape=jax.ShapeDtypeStruct((B, OUT_PAD), jnp.float32),
        grid=grid,
        in_specs=[
            # x: streamed / double-buffered per batch tile, raw 44-wide f32.
            pl.BlockSpec((tm, IN_DIMS), lambda i: (i, 0)),
            # Packed weights & biases: constant index -> fetched once, VMEM-resident.
            pl.BlockSpec((NUM_LAYERS, MAX_PAD, MAX_PAD), lambda i: (0, 0, 0)),
            pl.BlockSpec((NUM_LAYERS, MAX_PAD), lambda i: (0, 0)),
        ],
        out_specs=pl.BlockSpec((tm, OUT_PAD), lambda i: (i, 0)),
        scratch_shapes=[pltpu.VMEM((tm, K_PADS[0]), jnp.bfloat16)],
        compiler_params=pltpu.CompilerParams(
            dimension_semantics=("parallel",),    # 2x TC sharding on v7x
            vmem_limit_bytes=vmem_limit,
        ),
    )(x, w_packed, b_packed)

    # Strip the zero-padded logit lanes.
    return out_padded[:, :NUM_CLASSES]


def _reference_forward(x, params):
    """Plain-JAX reference mimicking the kernel numerics (bf16 inputs, f32 acc)."""
    h = x
    for i, (w, b) in enumerate(params):
        h = jnp.dot(h.astype(jnp.bfloat16), w.astype(jnp.bfloat16),
                    preferred_element_type=jnp.float32) + b
        if i != len(params) - 1:
            h = jnp.maximum(h, 0.0)
    return h


if __name__ == "__main__":
    key = jax.random.PRNGKey(0)
    key, kx = jax.random.split(key)

    B = 200   # exercises a 2-step grid (tm capped to 104) with a ragged last tile
    x = jax.random.normal(kx, (B, IN_DIMS), jnp.float32)
    params = init_params(key)
    w_packed, b_packed = pack_params(params)

    out = meta_classifier_forward(x, w_packed, b_packed)
    out = jax.block_until_ready(out)

    ref = _reference_forward(x, params)
    assert out.shape == (B, NUM_CLASSES), out.shape
    assert jnp.allclose(out, ref, atol=2e-2, rtol=2e-2), (
        float(jnp.max(jnp.abs(out - ref))))

    print("KERNEL_OK")
</pallas_src>

<mosaic_0001>
module attributes {stable_mosaic.version = 11 : i64} {
  func.func @_mlp_kernel(%arg0: i32, %arg1: memref<104x44xf32, #tpu.memory_space<vmem>>, %arg2: memref<8x256x256xbf16, #tpu.memory_space<vmem>>, %arg3: memref<8x256xf32, #tpu.memory_space<vmem>>, %arg4: memref<104x128xf32, #tpu.memory_space<vmem>>, %arg5: memref<104x128xbf16, #tpu.memory_space<vmem>>) attributes {dimension_semantics = [#tpu.dimension_semantics<parallel>], iteration_bounds = array<i64: 2>, scalar_prefetch = 0 : i64, scratch_operands = 1 : i64, tpu.core_type = #tpu.core_type<tc>, window_params = [{transform_indices = @transform_0, window_bounds = array<i64: 104, 44>}, {pipeline_mode = #tpu.pipeline_mode<synchronous>, transform_indices = @transform_1, window_bounds = array<i64: 8, 256, 256>}, {pipeline_mode = #tpu.pipeline_mode<synchronous>, transform_indices = @transform_2, window_bounds = array<i64: 8, 256>}, {transform_indices = @transform_3, window_bounds = array<i64: 104, 128>}]} {
    %cst = arith.constant 0.000000e+00 : bf16
    %0 = vector.broadcast %cst : bf16 to vector<104x128xbf16>
    %c0 = arith.constant 0 : index
    %c0_0 = arith.constant 0 : index
    %1 = vector.load %arg5[%c0, %c0_0] : memref<104x128xbf16, #tpu.memory_space<vmem>>, vector<104x128xbf16>
    tpu.vector_store %arg5[%c0, %c0_0], %0 {strides = array<i32>} : memref<104x128xbf16, #tpu.memory_space<vmem>>, vector<104x128xbf16>,
    %c0_1 = arith.constant 0 : index
    %c0_2 = arith.constant 0 : index
    %2 = vector.load %arg1[%c0_1, %c0_2] : memref<104x44xf32, #tpu.memory_space<vmem>>, vector<104x44xf32>
    %3 = arith.truncf %2 : vector<104x44xf32> to vector<104x44xbf16>
    %c0_3 = arith.constant 0 : index
    %c0_4 = arith.constant 0 : index
    %4 = vector.load %arg5[%c0_3, %c0_4] : memref<104x128xbf16, #tpu.memory_space<vmem>>, vector<104x44xbf16>
    tpu.vector_store %arg5[%c0_3, %c0_4], %3 {strides = array<i32>} : memref<104x128xbf16, #tpu.memory_space<vmem>>, vector<104x44xbf16>,
    %c0_5 = arith.constant 0 : index
    %c0_6 = arith.constant 0 : index
    %5 = vector.load %arg5[%c0_5, %c0_6] : memref<104x128xbf16, #tpu.memory_space<vmem>>, vector<104x128xbf16>
    %c0_7 = arith.constant 0 : index
    %c0_8 = arith.constant 0 : index
    %c0_9 = arith.constant 0 : index
    %6 = vector.load %arg2[%c0_7, %c0_8, %c0_9] : memref<8x256x256xbf16, #tpu.memory_space<vmem>>, vector<1x128x128xbf16>
    %7 = vector.shape_cast %6 : vector<1x128x128xbf16> to vector<128x128xbf16>
    %cst_10 = arith.constant dense<0.000000e+00> : vector<104x128xf32>
    %8 = tpu.matmul %5, %7, %cst_10 {dimension_numbers = #tpu.dot_dimension_numbers<[1], [0], [0], [1], [0, 0, 1, 1], [], []>} : vector<104x128xbf16>, vector<128x128xbf16>, vector<104x128xf32> -> vector<104x128xf32>
    %c0_11 = arith.constant 0 : index
    %c0_12 = arith.constant 0 : index
    %9 = vector.load %arg3[%c0_11, %c0_12] : memref<8x256xf32, #tpu.memory_space<vmem>>, vector<1x128xf32>
    %10 = vector.broadcast %9 : vector<1x128xf32> to vector<104x128xf32>
    %11 = arith.addf %8, %10 : vector<104x128xf32>
    %cst_13 = arith.constant 0.000000e+00 : f32
    %12 = vector.broadcast %cst_13 : f32 to vector<104x128xf32>
    %13 = arith.maximumf %11, %12 : vector<104x128xf32>
    %14 = arith.truncf %13 : vector<104x128xf32> to vector<104x128xbf16>
    %c1 = arith.constant 1 : index
    %c0_14 = arith.constant 0 : index
    %c0_15 = arith.constant 0 : index
    %15 = vector.load %arg2[%c1, %c0_14, %c0_15] : memref<8x256x256xbf16, #tpu.memory_space<vmem>>, vector<1x128x128xbf16>
    %16 = vector.shape_cast %15 : vector<1x128x128xbf16> to vector<128x128xbf16>
    %cst_16 = arith.constant dense<0.000000e+00> : vector<104x128xf32>
    %17 = tpu.matmul %14, %16, %cst_16 {dimension_numbers = #tpu.dot_dimension_numbers<[1], [0], [0], [1], [0, 0, 1, 1], [], []>} : vector<104x128xbf16>, vector<128x128xbf16>, vector<104x128xf32> -> vector<104x128xf32>
    %c1_17 = arith.constant 1 : index
    %c0_18 = arith.constant 0 : index
    %18 = vector.load %arg3[%c1_17, %c0_18] : memref<8x256xf32, #tpu.memory_space<vmem>>, vector<1x128xf32>
    %19 = vector.broadcast %18 : vector<1x128xf32> to vector<104x128xf32>
    %20 = arith.addf %17, %19 : vector<104x128xf32>
    %cst_19 = arith.constant 0.000000e+00 : f32
    %21 = vector.broadcast %cst_19 : f32 to vector<104x128xf32>
    %22 = arith.maximumf %20, %21 : vector<104x128xf32>
    %23 = arith.truncf %22 : vector<104x128xf32> to vector<104x128xbf16>
    %c2 = arith.constant 2 : index
    %c0_20 = arith.constant 0 : index
    %c0_21 = arith.constant 0 : index
    %24 = vector.load %arg2[%c2, %c0_20, %c0_21] : memref<8x256x256xbf16, #tpu.memory_space<vmem>>, vector<1x128x256xbf16>
    %25 = vector.shape_cast %24 : vector<1x128x256xbf16> to vector<128x256xbf16>
    %cst_22 = arith.constant dense<0.000000e+00> : vector<104x256xf32>
    %26 = tpu.matmul %23, %25, %cst_22 {dimension_numbers = #tpu.dot_dimension_numbers<[1], [0], [0], [1], [0, 0, 1, 1], [], []>} : vector<104x128xbf16>, vector<128x256xbf16>, vector<104x256xf32> -> vector<104x256xf32>
    %c2_23 = arith.constant 2 : index
    %c0_24 = arith.constant 0 : index
    %27 = vector.load %arg3[%c2_23, %c0_24] : memref<8x256xf32, #tpu.memory_space<vmem>>, vector<1x256xf32>
    %28 = vector.broadcast %27 : vector<1x256xf32> to vector<104x256xf32>
    %29 = arith.addf %26, %28 : vector<104x256xf32>
    %cst_25 = arith.constant 0.000000e+00 : f32
    %30 = vector.broadcast %cst_25 : f32 to vector<104x256xf32>
    %31 = arith.maximumf %29, %30 : vector<104x256xf32>
    %32 = arith.truncf %31 : vector<104x256xf32> to vector<104x256xbf16>
    %c3 = arith.constant 3 : index
    %c0_26 = arith.constant 0 : index
    %c0_27 = arith.constant 0 : index
    %33 = vector.load %arg2[%c3, %c0_26, %c0_27] : memref<8x256x256xbf16, #tpu.memory_space<vmem>>, vector<1x256x256xbf16>
    %34 = vector.shape_cast %33 : vector<1x256x256xbf16> to vector<256x256xbf16>
    %cst_28 = arith.constant dense<0.000000e+00> : vector<104x256xf32>
    %35 = tpu.matmul %32, %34, %cst_28 {dimension_numbers = #tpu.dot_dimension_numbers<[1], [0], [0], [1], [0, 0, 1, 1], [], []>} : vector<104x256xbf16>, vector<256x256xbf16>, vector<104x256xf32> -> vector<104x256xf32>
    %c3_29 = arith.constant 3 : index
    %c0_30 = arith.constant 0 : index
    %36 = vector.load %arg3[%c3_29, %c0_30] : memref<8x256xf32, #tpu.memory_space<vmem>>, vector<1x256xf32>
    %37 = vector.broadcast %36 : vector<1x256xf32> to vector<104x256xf32>
    %38 = arith.addf %35, %37 : vector<104x256xf32>
    %cst_31 = arith.constant 0.000000e+00 : f32
    %39 = vector.broadcast %cst_31 : f32 to vector<104x256xf32>
    %40 = arith.maximumf %38, %39 : vector<104x256xf32>
    %41 = arith.truncf %40 : vector<104x256xf32> to vector<104x256xbf16>
    %c4 = arith.constant 4 : index
    %c0_32 = arith.constant 0 : index
    %c0_33 = arith.constant 0 : index
    %42 = vector.load %arg2[%c4, %c0_32, %c0_33] : memref<8x256x256xbf16, #tpu.memory_space<vmem>>, vector<1x256x128xbf16>
    %43 = vector.shape_cast %42 : vector<1x256x128xbf16> to vector<256x128xbf16>
    %cst_34 = arith.constant dense<0.000000e+00> : vector<104x128xf32>
    %44 = tpu.matmul %41, %43, %cst_34 {dimension_numbers = #tpu.dot_dimension_numbers<[1], [0], [0], [1], [0, 0, 1, 1], [], []>} : vector<104x256xbf16>, vector<256x128xbf16>, vector<104x128xf32> -> vector<104x128xf32>
    %c4_35 = arith.constant 4 : index
    %c0_36 = arith.constant 0 : index
    %45 = vector.load %arg3[%c4_35, %c0_36] : memref<8x256xf32, #tpu.memory_space<vmem>>, vector<1x128xf32>
    %46 = vector.broadcast %45 : vector<1x128xf32> to vector<104x128xf32>
    %47 = arith.addf %44, %46 : vector<104x128xf32>
    %cst_37 = arith.constant 0.000000e+00 : f32
    %48 = vector.broadcast %cst_37 : f32 to vector<104x128xf32>
    %49 = arith.maximumf %47, %48 : vector<104x128xf32>
    %50 = arith.truncf %49 : vector<104x128xf32> to vector<104x128xbf16>
    %c5 = arith.constant 5 : index
    %c0_38 = arith.constant 0 : index
    %c0_39 = arith.constant 0 : index
    %51 = vector.load %arg2[%c5, %c0_38, %c0_39] : memref<8x256x256xbf16, #tpu.memory_space<vmem>>, vector<1x128x128xbf16>
    %52 = vector.shape_cast %51 : vector<1x128x128xbf16> to vector<128x128xbf16>
    %cst_40 = arith.constant dense<0.000000e+00> : vector<104x128xf32>
    %53 = tpu.matmul %50, %52, %cst_40 {dimension_numbers = #tpu.dot_dimension_numbers<[1], [0], [0], [1], [0, 0, 1, 1], [], []>} : vector<104x128xbf16>, vector<128x128xbf16>, vector<104x128xf32> -> vector<104x128xf32>
    %c5_41 = arith.constant 5 : index
    %c0_42 = arith.constant 0 : index
    %54 = vector.load %arg3[%c5_41, %c0_42] : memref<8x256xf32, #tpu.memory_space<vmem>>, vector<1x128xf32>
    %55 = vector.broadcast %54 : vector<1x128xf32> to vector<104x128xf32>
    %56 = arith.addf %53, %55 : vector<104x128xf32>
    %cst_43 = arith.constant 0.000000e+00 : f32
    %57 = vector.broadcast %cst_43 : f32 to vector<104x128xf32>
    %58 = arith.maximumf %56, %57 : vector<104x128xf32>
    %59 = arith.truncf %58 : vector<104x128xf32> to vector<104x128xbf16>
    %c6 = arith.constant 6 : index
    %c0_44 = arith.constant 0 : index
    %c0_45 = arith.constant 0 : index
    %60 = vector.load %arg2[%c6, %c0_44, %c0_45] : memref<8x256x256xbf16, #tpu.memory_space<vmem>>, vector<1x128x128xbf16>
    %61 = vector.shape_cast %60 : vector<1x128x128xbf16> to vector<128x128xbf16>
    %cst_46 = arith.constant dense<0.000000e+00> : vector<104x128xf32>
    %62 = tpu.matmul %59, %61, %cst_46 {dimension_numbers = #tpu.dot_dimension_numbers<[1], [0], [0], [1], [0, 0, 1, 1], [], []>} : vector<104x128xbf16>, vector<128x128xbf16>, vector<104x128xf32> -> vector<104x128xf32>
    %c6_47 = arith.constant 6 : index
    %c0_48 = arith.constant 0 : index
    %63 = vector.load %arg3[%c6_47, %c0_48] : memref<8x256xf32, #tpu.memory_space<vmem>>, vector<1x128xf32>
    %64 = vector.broadcast %63 : vector<1x128xf32> to vector<104x128xf32>
    %65 = arith.addf %62, %64 : vector<104x128xf32>
    %cst_49 = arith.constant 0.000000e+00 : f32
    %66 = vector.broadcast %cst_49 : f32 to vector<104x128xf32>
    %67 = arith.maximumf %65, %66 : vector<104x128xf32>
    %68 = arith.truncf %67 : vector<104x128xf32> to vector<104x128xbf16>
    %c7 = arith.constant 7 : index
    %c0_50 = arith.constant 0 : index
    %c0_51 = arith.constant 0 : index
    %69 = vector.load %arg2[%c7, %c0_50, %c0_51] : memref<8x256x256xbf16, #tpu.memory_space<vmem>>, vector<1x128x128xbf16>
    %70 = vector.shape_cast %69 : vector<1x128x128xbf16> to vector<128x128xbf16>
    %cst_52 = arith.constant dense<0.000000e+00> : vector<104x128xf32>
    %71 = tpu.matmul %68, %70, %cst_52 {dimension_numbers = #tpu.dot_dimension_numbers<[1], [0], [0], [1], [0, 0, 1, 1], [], []>} : vector<104x128xbf16>, vector<128x128xbf16>, vector<104x128xf32> -> vector<104x128xf32>
    %c7_53 = arith.constant 7 : index
    %c0_54 = arith.constant 0 : index
    %72 = vector.load %arg3[%c7_53, %c0_54] : memref<8x256xf32, #tpu.memory_space<vmem>>, vector<1x128xf32>
    %73 = vector.broadcast %72 : vector<1x128xf32> to vector<104x128xf32>
    %74 = arith.addf %71, %73 : vector<104x128xf32>
    %c0_55 = arith.constant 0 : index
    %c0_56 = arith.constant 0 : index
    %75 = vector.load %arg4[%c0_55, %c0_56] : memref<104x128xf32, #tpu.memory_space<vmem>>, vector<104x128xf32>
    tpu.vector_store %arg4[%c0_55, %c0_56], %74 {strides = array<i32>} : memref<104x128xf32, #tpu.memory_space<vmem>>, vector<104x128xf32>,
    return
  }
  func.func @transform_0(%arg0: i32) -> (i32, i32) {
    %c0_i32 = arith.constant 0 : i32
    %c0_i32_0 = arith.constant 0 : i32
    return %arg0, %c0_i32 : i32, i32
  }
  func.func @transform_1(%arg0: i32) -> (i32, i32, i32) {
    %c0_i32 = arith.constant 0 : i32
    %c0_i32_0 = arith.constant 0 : i32
    %c0_i32_1 = arith.constant 0 : i32
    %c0_i32_2 = arith.constant 0 : i32
    return %c0_i32, %c0_i32_0, %c0_i32_1 : i32, i32, i32
  }
  func.func @transform_2(%arg0: i32) -> (i32, i32) {
    %c0_i32 = arith.constant 0 : i32
    %c0_i32_0 = arith.constant 0 : i32
    %c0_i32_1 = arith.constant 0 : i32
    return %c0_i32, %c0_i32_0 : i32, i32
  }
  func.func @transform_3(%arg0: i32) -> (i32, i32) {
    %c0_i32 = arith.constant 0 : i32
    %c0_i32_0 = arith.constant 0 : i32
    return %arg0, %c0_i32 : i32, i32
  }
}

</mosaic_0001>

<llo_original>
// kernel: meta_classifier_forward.1
$region0: #{meta_classifier_forward.1}
  #allocation0 [shape = 'u32[]', space=smem, size = 0x4, offset = 0x4, fixed_abs, tag = 'smem constant byte address 0x4 - core index']
  #allocation1 [shape = 'u32[72,128]{1,0:T(1,128)}', space=vmem, size = 0x9000, scoped, tag = 'internal scratch']
  #allocation2 [shape = 'bf16[104,128]{1,0:T(8,128)(2,1)}', space=vmem, size = 0x6800, scoped, tag = 'scratch operand']
  %s0 = inlined_call_operand.vmem [shape: f32[200,44], index: 0, kind: input, shape index: {}]
  %s1 = inlined_call_operand.hbm [shape: bf16[8,256,256], index: 1, kind: input, shape index: {}]
  %s2 = inlined_call_operand.vmem [shape: f32[8,256], index: 2, kind: input, shape index: {}]
  %s3 = inlined_call_operand.vmem [shape: f32[200,128], index: 3, kind: output, shape index: {}]
  %s4 = sld [smem:[#allocation0]]
  $region97: #{meta_classifier_forward.1} parent=0
    _
  %s6 = ssub.s32 1, %s4
  %s7 = scalar_select 0, %s6, %s4
  $region1: #{meta_classifier_forward.1} parent=0
    #allocation3 [shape = 'u8[1048576]{0}', space=vmem, size = 0x100000, scoped, tag = 'input window, operand 1, single buffered']
    #allocation4 [shape = 's32[2]{0}', space=sflag, size = 0x8, scoped, tag = 'scoped memory for meta_classifier_forward.1']
    #allocation5 [shape = 'u8[106496]{0}', space=vmem, size = 0x1a000, scoped, tag = 'output window, operand 0']
    %8 = vsyncpa [#allocation4], 0
    loop: start=0, step=1, limit=4
    $region2: #{meta_classifier_forward.1} parent=1 // loop_pre_header
      _
    $region3: #{meta_classifier_forward.1} parent=1 // loop_header
      %s10 = sphi 0, %s14
      %p11 = scmp.ge.s32.totalorder %s10, 4
      %s20 = sphi 0, %s22
      %s23 = sphi 0, %s20
      %s24 = sphi 0, %s23
      %s40 = sphi 0, %s24
      %s44 = sphi 0, %s44
      %s46 = sphi 0, %s44
      %s47 = sphi 0, %s46
      %s61 = sphi 0, %s47
      %s65 = sphi 0, %s65
      %s67 = sphi 0, %s65
      %s68 = sphi 0, %s67
      %s82 = sphi 0, %s68
      %s88 = sphi 0, %s90
      %s91 = sphi 0, %s88
      %s92 = sphi 0, %s91
      %s108 = sphi 0, %s92
    $region4: #{meta_classifier_forward.1} parent=1 // loop_header_branch
      %13 = sbr.rel (%p11) target = $region8
    $region5: #{meta_classifier_forward.1} parent=1 // loop_body
      %s15 = ssub.s32 %s10, 1
      %s16 = ssub.s32 %s10, 2
      %s17 = sadd.s32 %s10, 1
      %s18 = ssub.s32 %s10, %s17
      %p19 = scmp.eq.s32.totalorder %s18, 0
      %s21 = sadd.s32 %s20, 1
      %s22 = scalar_select %p19, %s20, %s21
      %p25 = pneg %p19
      %p26 = scmp.eq.s32.totalorder %s10, 1
      %p27 = por %p25, %p26
      %p28 = scmp.ne.s32.totalorder %s20, %s23
      %p29 = scmp.eq.s32.totalorder %s10, 0
      %p30 = por %p28, %p29
      %p31 = scmp.ne.s32.totalorder %s20, %s23
      %p32 = scmp.eq.s32.totalorder %s15, 1
      %p33 = por %p31, %p32
      %p34 = scmp.ne.s32.totalorder %s23, %s24
      %p35 = scmp.eq.s32.totalorder %s15, 0
      %p36 = por %p34, %p35
      %p37 = scmp.ne.s32.totalorder %s23, %s24
      %p38 = scmp.eq.s32.totalorder %s16, 1
      %p39 = por %p37, %p38
      %p41 = scmp.ne.s32.totalorder %s24, %s40
      %p42 = scmp.eq.s32.totalorder %s16, 0
      %p43 = por %p41, %p42
      %s45 = sadd.s32 %s44, 1
      %p48 = scmp.eq.s32.totalorder %s10, 1
      %p49 = scmp.ne.s32.totalorder %s44, %s46
      %p50 = scmp.eq.s32.totalorder %s10, 0
      %p51 = por %p49, %p50
      %p52 = scmp.ne.s32.totalorder %s44, %s46
      %p53 = scmp.eq.s32.totalorder %s15, 1
      %p54 = por %p52, %p53
      %p55 = scmp.ne.s32.totalorder %s46, %s47
      %p56 = scmp.eq.s32.totalorder %s15, 0
      %p57 = por %p55, %p56
      %p58 = scmp.ne.s32.totalorder %s46, %s47
      %p59 = scmp.eq.s32.totalorder %s16, 1
      %p60 = por %p58, %p59
      %p62 = scmp.ne.s32.totalorder %s47, %s61
      %p63 = scmp.eq.s32.totalorder %s16, 0
      %p64 = por %p62, %p63
      %s66 = sadd.s32 %s65, 1
      %p69 = scmp.eq.s32.totalorder %s10, 1
      %p70 = scmp.ne.s32.totalorder %s65, %s67
      %p71 = scmp.eq.s32.totalorder %s10, 0
      %p72 = por %p70, %p71
      %p73 = scmp.ne.s32.totalorder %s65, %s67
      %p74 = scmp.eq.s32.totalorder %s15, 1
      %p75 = por %p73, %p74
      %p76 = scmp.ne.s32.totalorder %s67, %s68
      %p77 = scmp.eq.s32.totalorder %s15, 0
      %p78 = por %p76, %p77
      %p79 = scmp.ne.s32.totalorder %s67, %s68
      %p80 = scmp.eq.s32.totalorder %s16, 1
      %p81 = por %p79, %p80
      %p83 = scmp.ne.s32.totalorder %s68, %s82
      %p84 = scmp.eq.s32.totalorder %s16, 0
      %p85 = por %p83, %p84
      %s86 = ssub.s32 %s10, %s17
      %p87 = scmp.eq.s32.totalorder %s86, 0
      %s89 = sadd.s32 %s88, 1
      %s90 = scalar_select %p87, %s88, %s89
      %p93 = pneg %p87
      %p94 = scmp.eq.s32.totalorder %s10, 1
      %p95 = por %p93, %p94
      %p96 = scmp.ne.s32.totalorder %s88, %s91
      %p97 = scmp.eq.s32.totalorder %s10, 0
      %p98 = por %p96, %p97
      %p99 = scmp.ne.s32.totalorder %s88, %s91
      %p100 = scmp.eq.s32.totalorder %s15, 1
      %p101 = por %p99, %p100
      %p102 = scmp.ne.s32.totalorder %s91, %s92
      %p103 = scmp.eq.s32.totalorder %s15, 0
      %p104 = por %p102, %p103
      %p105 = scmp.ne.s32.totalorder %s91, %s92
      %p106 = scmp.eq.s32.totalorder %s16, 1
      %p107 = por %p105, %p106
      %p109 = scmp.ne.s32.totalorder %s92, %s108
      %p110 = scmp.eq.s32.totalorder %s16, 0
      %p111 = por %p109, %p110
      %p112 = scmp.le.s32.totalorder 1, %s10
      %p113 = scmp.lt.s32.totalorder %s10, 3
      %p114 = pnand %p112, %p113
      %p115 = pneg %p114
      // Predicated region
      $region9: #{meta_classifier_forward.1} parent=5 // pred_check
        _
      $region10: #{meta_classifier_forward.1} parent=5 // pred_check_branch
        %117 = sbr.rel (%p114) target = $region12
      $region11: #{meta_classifier_forward.1} parent=5 // pred_region
        %s118 = ssub.s32 %s10, 1
        // Predicated region
        $region13: #{meta_classifier_forward.1} parent=11 // pred_check
          %p119 = pneg %p57
        $region14: #{meta_classifier_forward.1} parent=11 // pred_check_branch
          %121 = sbr.rel (%p119) target = $region16
        $region15: #{meta_classifier_forward.1} parent=11 // pred_region
          %123 = vsyncadd [#allocation4], 0
          %s124 = sshll.u32 %s1, 4
          %s125 = int_to_ptr.hbm [resolvable:$true] %s124
          %s126 = sshll.u32 [#allocation3], 4
          %s127 = int_to_ptr.vmem [resolvable:$true] %s126
          %132 = dma.hbm_to_vmem [thread:$0]  %s125, 32768, %s127, [#allocation4], 128, 128, 8
        $region16: #{meta_classifier_forward.1} parent=11 // pred_fallthru
          _
        // Predicated region
        $region17: #{meta_classifier_forward.1} parent=11 // pred_check
          %p133 = pneg %p78
        $region18: #{meta_classifier_forward.1} parent=11 // pred_check_branch
          %135 = sbr.rel (%p133) target = $region20
        $region19: #{meta_classifier_forward.1} parent=11 // pred_region
          _
        $region20: #{meta_classifier_forward.1} parent=11 // pred_fallthru
          _
      $region12: #{meta_classifier_forward.1} parent=5 // pred_fallthru
        _
      %p136 = scmp.lt.s32.totalorder %s10, 2
      // Predicated region
      $region21: #{meta_classifier_forward.1} parent=5 // pred_check
        %p137 = pneg %p136
      $region22: #{meta_classifier_forward.1} parent=5 // pred_check_branch
        %139 = sbr.rel (%p137) target = $region24
      $region23: #{meta_classifier_forward.1} parent=5 // pred_region
        // Predicated region
        $region25: #{meta_classifier_forward.1} parent=23 // pred_check
          %p140 = pneg %p30
        $region26: #{meta_classifier_forward.1} parent=23 // pred_check_branch
          %142 = sbr.rel (%p140) target = $region28
        $region27: #{meta_classifier_forward.1} parent=23 // pred_region
          %s143 = smul.u32 13, %s10
          %s144 = ssub.s32 25, %s143
          %p145 = scmp.lt.s32.totalorder %s144, 13
          %s146 = scalar_select %p145, %s144, 13
          %s147 = smul.u32 8, %s146
          %p148 = scmp.lt.s32.totalorder %s143, 24
          %s149 = scalar_select %p148, %s143, 24
          %s150 = smul.addr %s149, 8
          %s151 = scalar_lea.vmem %s0, %s150
          %s152 = smul.u32 13, %s10
          %s153 = ssub.s32 25, %s152
          %p154 = scmp.lt.s32.totalorder %s153, 13
          %s155 = scalar_select %p154, %s153, 13
          %s156 = smul.u32 8, %s155
        $region28: #{meta_classifier_forward.1} parent=23 // pred_fallthru
          _
      $region24: #{meta_classifier_forward.1} parent=5 // pred_fallthru
        _
      %p157 = scmp.le.s32.totalorder 1, %s10
      %p158 = scmp.lt.s32.totalorder %s10, 3
      %p159 = pnand %p157, %p158
      %p160 = pneg %p159
      // Predicated region
      $region29: #{meta_classifier_forward.1} parent=5 // pred_check
        _
      $region30: #{meta_classifier_forward.1} parent=5 // pred_check_branch
        %162 = sbr.rel (%p159) target = $region32
      $region31: #{meta_classifier_forward.1} parent=5 // pred_region
        %s163 = ssub.s32 %s10, 1
        // Predicated region
        $region33: #{meta_classifier_forward.1} parent=31 // pred_check
          %p164 = pneg %p57
        $region34: #{meta_classifier_forward.1} parent=31 // pred_check_branch
          %166 = sbr.rel (%p164) target = $region36
        $region35: #{meta_classifier_forward.1} parent=31 // pred_region
          %168 = dma.done [#allocation4], 32768
        $region36: #{meta_classifier_forward.1} parent=31 // pred_fallthru
          _
        %s169 = smul.u32 13, %s15
        %s170 = ssub.s32 25, %s169
        %p171 = scmp.lt.s32.totalorder %s170, 13
        %s172 = scalar_select %p171, %s170, 13
        %s173 = smul.u32 8, %s172
        %p174 = scmp.lt.s32.totalorder %s169, 24
        %s175 = scalar_select %p174, %s169, 24
        %s176 = smul.addr %s175, 8
        %s177 = scalar_lea.vmem %s0, %s176
        %p178 = pneg %p36
        %p179 = pneg %p33
        %p180 = pneg %p57
        %p181 = pneg %p54
        %p182 = pneg %p78
        %p183 = pneg %p75
        %p184 = pneg %p104
        %p185 = pneg %p101
        %s186 = sand.u32 %s91, 1
        %s187 = sand.u32 %s91, 1
        %s188 = smul.addr %s187, 104
        %s189 = scalar_lea.vmem [#allocation5], %s188
        %s190 = smul.u32 13, %s15
        %s191 = ssub.s32 25, %s190
        %p192 = scmp.lt.s32.totalorder %s191, 13
        %s193 = scalar_select %p192, %s191, 13
        %s194 = smul.u32 8, %s193
        %p195 = scmp.lt.s32.totalorder %s190, 24
        %s196 = scalar_select %p195, %s190, 24
        %s197 = smul.addr %s196, 8
        %s198 = scalar_lea.vmem %s0, %s197
        %s199 = smul.u32 13, %s15
        %s200 = ssub.s32 25, %s199
        %p201 = scmp.lt.s32.totalorder %s200, 13
        %s202 = scalar_select %p201, %s200, 13
        %s203 = smul.u32 8, %s202
        %s204 = smul.u32 13, %s15
        %s205 = ssub.s32 25, %s204
        %p206 = scmp.lt.s32.totalorder %s205, 13
        %s207 = scalar_select %p206, %s205, 13
        %s208 = smul.u32 8, %s207
        %210 = vst [vmem:[#allocation2] sm:$0xf] 0
        %211 = vst [vmem:[#allocation2 + $0x4] sm:$0xf] 0
        %212 = vst [vmem:[#allocation2 + $0x8] sm:$0xf] 0
        %213 = vst [vmem:[#allocation2 + $0xc] sm:$0xf] 0
        %214 = vst [vmem:[#allocation2 + $0x10] sm:$0xf] 0
        %215 = vst [vmem:[#allocation2 + $0x14] sm:$0xf] 0
        %216 = vst [vmem:[#allocation2 + $0x18] sm:$0xf] 0
        %217 = vst [vmem:[#allocation2 + $0x1c] sm:$0xf] 0
        %218 = vst [vmem:[#allocation2 + $0x20] sm:$0xf] 0
        %219 = vst [vmem:[#allocation2 + $0x24] sm:$0xf] 0
        %220 = vst [vmem:[#allocation2 + $0x28] sm:$0xf] 0
        %221 = vst [vmem:[#allocation2 + $0x2c] sm:$0xf] 0
        %222 = vst [vmem:[#allocation2 + $0x30] sm:$0xf] 0
        %v223 = vld [vmem:[%s198] sm:$0xff]
        %v224 = vld [vmem:[%s198 + $0x8] sm:$0xff]
        %v225 = vld [vmem:[%s198 + $0x10] sm:$0xff]
        %v226 = vld [vmem:[%s198 + $0x18] sm:$0xff]
        %v227 = vld [vmem:[%s198 + $0x20] sm:$0xff]
        %v228 = vld [vmem:[%s198 + $0x28] sm:$0xff]
        %v229 = vld [vmem:[%s198 + $0x30] sm:$0xff]
        %v230 = vld [vmem:[%s198 + $0x38] sm:$0xff]
        %v231 = vld [vmem:[%s198 + $0x40] sm:$0xff]
        %v232 = vld [vmem:[%s198 + $0x48] sm:$0xff]
        %v233 = vld [vmem:[%s198 + $0x50] sm:$0xff]
        %v234 = vld [vmem:[%s198 + $0x58] sm:$0xff]
        %v235 = vld [vmem:[%s198 + $0x60] sm:$0xff]
        %v236 = vpack.c.bf16 %v223, %v223
        %v237 = vpack.c.bf16 %v224, %v224
        %v238 = vpack.c.bf16 %v225, %v225
        %v239 = vpack.c.bf16 %v226, %v226
        %v240 = vpack.c.bf16 %v227, %v227
        %v241 = vpack.c.bf16 %v228, %v228
        %v242 = vpack.c.bf16 %v229, %v229
        %v243 = vpack.c.bf16 %v230, %v230
        %v244 = vpack.c.bf16 %v231, %v231
        %v245 = vpack.c.bf16 %v232, %v232
        %v246 = vpack.c.bf16 %v233, %v233
        %v247 = vpack.c.bf16 %v234, %v234
        %v248 = vpack.c.bf16 %v235, %v235
        %vm249 = vcmask 355328
        %250 = vst.msk [vmem:[#allocation2] sm:$0xf] %vm249, %v236
        %251 = vst.msk [vmem:[#allocation2 + $0x4] sm:$0xf] %vm249, %v237
        %252 = vst.msk [vmem:[#allocation2 + $0x8] sm:$0xf] %vm249, %v238
        %253 = vst.msk [vmem:[#allocation2 + $0xc] sm:$0xf] %vm249, %v239
        %254 = vst.msk [vmem:[#allocation2 + $0x10] sm:$0xf] %vm249, %v240
        %255 = vst.msk [vmem:[#allocation2 + $0x14] sm:$0xf] %vm249, %v241
        %256 = vst.msk [vmem:[#allocation2 + $0x18] sm:$0xf] %vm249, %v242
        %257 = vst.msk [vmem:[#allocation2 + $0x1c] sm:$0xf] %vm249, %v243
        %258 = vst.msk [vmem:[#allocation2 + $0x20] sm:$0xf] %vm249, %v244
        %259 = vst.msk [vmem:[#allocation2 + $0x24] sm:$0xf] %vm249, %v245
        %260 = vst.msk [vmem:[#allocation2 + $0x28] sm:$0xf] %vm249, %v246
        %261 = vst.msk [vmem:[#allocation2 + $0x2c] sm:$0xf] %vm249, %v247
        %262 = vst.msk [vmem:[#allocation2 + $0x30] sm:$0xf] %vm249, %v248
        %v263 = vld [vmem:[#allocation2] sm:$0xf]
        %v264 = vld [vmem:[#allocation2 + $0x4] sm:$0xf]
        %v265 = vld [vmem:[#allocation2 + $0x8] sm:$0xf]
        %v266 = vld [vmem:[#allocation2 + $0xc] sm:$0xf]
        %v267 = vld [vmem:[#allocation2 + $0x10] sm:$0xf]
        %v268 = vld [vmem:[#allocation2 + $0x14] sm:$0xf]
        %v269 = vld [vmem:[#allocation2 + $0x18] sm:$0xf]
        %v270 = vld [vmem:[#allocation2 + $0x1c] sm:$0xf]
        %v271 = vld [vmem:[#allocation2 + $0x20] sm:$0xf]
        %v272 = vld [vmem:[#allocation2 + $0x24] sm:$0xf]
        %v273 = vld [vmem:[#allocation2 + $0x28] sm:$0xf]
        %v274 = vld [vmem:[#allocation2 + $0x2c] sm:$0xf]
        %v275 = vld [vmem:[#allocation2 + $0x30] sm:$0xf]
        %v276 = vld [vmem:[#allocation3] sm:$0xf]
        %v277 = vld [vmem:[#allocation3 + $0x8] sm:$0xf]
        %v278 = vld [vmem:[#allocation3 + $0x10] sm:$0xf]
        %v279 = vld [vmem:[#allocation3 + $0x18] sm:$0xf]
        %v280 = vld [vmem:[#allocation3 + $0x20] sm:$0xf]
        %v281 = vld [vmem:[#allocation3 + $0x28] sm:$0xf]
        %v282 = vld [vmem:[#allocation3 + $0x30] sm:$0xf]
        %v283 = vld [vmem:[#allocation3 + $0x38] sm:$0xf]
        %v284 = vld [vmem:[#allocation3 + $0x40] sm:$0xf]
        %v285 = vld [vmem:[#allocation3 + $0x48] sm:$0xf]
        %v286 = vld [vmem:[#allocation3 + $0x50] sm:$0xf]
        %v287 = vld [vmem:[#allocation3 + $0x58] sm:$0xf]
        %v288 = vld [vmem:[#allocation3 + $0x60] sm:$0xf]
        %v289 = vld [vmem:[#allocation3 + $0x68] sm:$0xf]
        %v290 = vld [vmem:[#allocation3 + $0x70] sm:$0xf]
        %v291 = vld [vmem:[#allocation3 + $0x78] sm:$0xf]
        %v292 = vld [vmem:[%s2] ss:$0 sm:$0xff]
        %v306 = vunpack.c.l.b16 %v263
        %v307 = vunpack.c.l.b16 %v264
        %v308 = vunpack.c.l.b16 %v265
        %v309 = vunpack.c.l.b16 %v266
        %v310 = vunpack.c.l.b16 %v267
        %v311 = vunpack.c.l.b16 %v268
        %v312 = vunpack.c.l.b16 %v269
        %v313 = vunpack.c.l.b16 %v270
        %v314 = vunpack.c.l.b16 %v271
        %v315 = vunpack.c.l.b16 %v272
        %v316 = vunpack.c.l.b16 %v273
        %v317 = vunpack.c.l.b16 %v274
        %v318 = vunpack.c.l.b16 %v275
        %v319 = vpack.c.b16 %v307, %v306
        %v320 = vpack.c.b16 %v309, %v308
        %v321 = vpack.c.b16 %v311, %v310
        %v322 = vpack.c.b16 %v313, %v312
        %v323 = vpack.c.b16 %v315, %v314
        %v324 = vpack.c.b16 %v317, %v316
        %v325 = vpack.c.b16 %v318, %v318
        %v349 = vunpack.c.l.b16 %v276
        %v350 = vunpack.c.l.b16 %v277
        %v351 = vunpack.c.l.b16 %v278
        %v352 = vunpack.c.l.b16 %v279
        %v353 = vunpack.c.l.b16 %v280
        %v354 = vunpack.c.l.b16 %v281
        %v355 = vunpack.c.l.b16 %v282
        %v356 = vunpack.c.l.b16 %v283
        %v357 = vunpack.c.l.b16 %v284
        %v358 = vunpack.c.l.b16 %v285
        %v359 = vunpack.c.l.b16 %v286
        %v360 = vunpack.c.l.b16 %v287
        %v361 = vunpack.c.l.b16 %v288
        %v362 = vunpack.c.l.b16 %v289
        %v363 = vunpack.c.l.b16 %v290
        %v364 = vunpack.c.l.b16 %v291
        %v365 = vpack.c.b16 %v350, %v349
        %v366 = vpack.c.b16 %v352, %v351
        %v367 = vpack.c.b16 %v354, %v353
        %v368 = vpack.c.b16 %v356, %v355
        %v369 = vpack.c.b16 %v358, %v357
        %v370 = vpack.c.b16 %v360, %v359
        %v371 = vpack.c.b16 %v362, %v361
        %v372 = vpack.c.b16 %v364, %v363
        %381 = vmatpush.bf16.msra.mxu0 %v372
        %382 = vmatpush.bf16.msra.mxu0 %v371
        %383 = vmatpush.bf16.msra.mxu0 %v370
        %384 = vmatpush.bf16.msra.mxu0 %v369
        %385 = vmatpush.bf16.msra.mxu0 %v368
        %386 = vmatpush.bf16.msra.mxu0 %v367
        %387 = vmatpush.bf16.msra.mxu0 %v366
        %388 = vmatpush.bf16.msra.mxu0 %v365
        %389 = vmatmul.bf16.gmra.mxu0 %v319
        %v390 = vpop.f32.mrf.mxu0
        %v391 = vadd.f32 %v292, %v390
        %v392 = vpop.f32.mrf.mxu0
        %v393 = vadd.f32 %v292, %v392
        %394 = vmatmul.bf16.gmra.mxu0 %v320
        %v395 = vpop.f32.mrf.mxu0
        %v396 = vadd.f32 %v292, %v395
        %v397 = vpop.f32.mrf.mxu0
        %v398 = vadd.f32 %v292, %v397
        %399 = vmatmul.bf16.gmra.mxu0 %v321
        %v400 = vpop.f32.mrf.mxu0
        %v401 = vadd.f32 %v292, %v400
        %v402 = vpop.f32.mrf.mxu0
        %v403 = vadd.f32 %v292, %v402
        %404 = vmatmul.bf16.gmra.mxu0 %v322
        %v405 = vpop.f32.mrf.mxu0
        %v406 = vadd.f32 %v292, %v405
        %v407 = vpop.f32.mrf.mxu0
        %v408 = vadd.f32 %v292, %v407
        %409 = vmatmul.bf16.gmra.mxu0 %v323
        %v410 = vpop.f32.mrf.mxu0
        %v411 = vadd.f32 %v292, %v410
        %v412 = vpop.f32.mrf.mxu0
        %v413 = vadd.f32 %v292, %v412
        %414 = vmatmul.bf16.gmra.mxu0 %v324
        %v415 = vpop.f32.mrf.mxu0
        %v416 = vadd.f32 %v292, %v415
        %v417 = vpop.f32.mrf.mxu0
        %v418 = vadd.f32 %v292, %v417
        %419 = vmatmul.bf16.gmra.mxu0 %v325
        %v420 = vpop.f32.mrf.mxu0
        %v421 = vadd.f32 %v292, %v420
        %v422 = vpop.f32.mrf.mxu0
        %423 = vdwg.mxu0
        %v424 = vmax.f32 %v391, 0.0
        %v425 = vmax.f32 %v393, 0.0
        %v426 = vmax.f32 %v396, 0.0
        %v427 = vmax.f32 %v398, 0.0
        %v428 = vmax.f32 %v401, 0.0
        %v429 = vmax.f32 %v403, 0.0
        %v430 = vmax.f32 %v406, 0.0
        %v431 = vmax.f32 %v408, 0.0
        %v432 = vmax.f32 %v411, 0.0
        %v433 = vmax.f32 %v413, 0.0
        %v434 = vmax.f32 %v416, 0.0
        %v435 = vmax.f32 %v418, 0.0
        %v436 = vmax.f32 %v421, 0.0
        %v437 = vpack.c.bf16 %v425, %v424
        %v438 = vpack.c.bf16 %v427, %v426
        %v439 = vpack.c.bf16 %v429, %v428
        %v440 = vpack.c.bf16 %v431, %v430
        %v441 = vpack.c.bf16 %v433, %v432
        %v442 = vpack.c.bf16 %v435, %v434
        %v443 = vpack.c.bf16 %v436, %v436
        %s444 = scalar_lea.vmem [#allocation3], 256
        %v445 = vld [vmem:[%s444] sm:$0xf]
        %v446 = vld [vmem:[%s444 + $0x8] sm:$0xf]
        %v447 = vld [vmem:[%s444 + $0x10] sm:$0xf]
        %v448 = vld [vmem:[%s444 + $0x18] sm:$0xf]
        %v449 = vld [vmem:[%s444 + $0x20] sm:$0xf]
        %v450 = vld [vmem:[%s444 + $0x28] sm:$0xf]
        %v451 = vld [vmem:[%s444 + $0x30] sm:$0xf]
        %v452 = vld [vmem:[%s444 + $0x38] sm:$0xf]
        %v453 = vld [vmem:[%s444 + $0x40] sm:$0xf]
        %v454 = vld [vmem:[%s444 + $0x48] sm:$0xf]
        %v455 = vld [vmem:[%s444 + $0x50] sm:$0xf]
        %v456 = vld [vmem:[%s444 + $0x58] sm:$0xf]
        %v457 = vld [vmem:[%s444 + $0x60] sm:$0xf]
        %v458 = vld [vmem:[%s444 + $0x68] sm:$0xf]
        %v459 = vld [vmem:[%s444 + $0x70] sm:$0xf]
        %v460 = vld [vmem:[%s444 + $0x78] sm:$0xf]
        %v461 = vld [vmem:[%s2 + $0x1] ss:$0 sm:$0xff]
        %v478 = vunpack.c.l.b16 %v445
        %v479 = vunpack.c.l.b16 %v446
        %v480 = vunpack.c.l.b16 %v447
        %v481 = vunpack.c.l.b16 %v448
        %v482 = vunpack.c.l.b16 %v449
        %v483 = vunpack.c.l.b16 %v450
        %v484 = vunpack.c.l.b16 %v451
        %v485 = vunpack.c.l.b16 %v452
        %v486 = vunpack.c.l.b16 %v453
        %v487 = vunpack.c.l.b16 %v454
        %v488 = vunpack.c.l.b16 %v455
        %v489 = vunpack.c.l.b16 %v456
        %v490 = vunpack.c.l.b16 %v457
        %v491 = vunpack.c.l.b16 %v458
        %v492 = vunpack.c.l.b16 %v459
        %v493 = vunpack.c.l.b16 %v460
        %v494 = vpack.c.b16 %v479, %v478
        %v495 = vpack.c.b16 %v481, %v480
        %v496 = vpack.c.b16 %v483, %v482
        %v497 = vpack.c.b16 %v485, %v484
        %v498 = vpack.c.b16 %v487, %v486
        %v499 = vpack.c.b16 %v489, %v488
        %v500 = vpack.c.b16 %v491, %v490
        %v501 = vpack.c.b16 %v493, %v492
        %510 = vmatpush.bf16.msra.mxu0 %v501
        %511 = vmatpush.bf16.msra.mxu0 %v500
        %512 = vmatpush.bf16.msra.mxu0 %v499
        %513 = vmatpush.bf16.msra.mxu0 %v498
        %514 = vmatpush.bf16.msra.mxu0 %v497
        %515 = vmatpush.bf16.msra.mxu0 %v496
        %516 = vmatpush.bf16.msra.mxu0 %v495
        %517 = vmatpush.bf16.msra.mxu0 %v494
        %518 = vmatmul.bf16.gmra.mxu0 %v437
        %v519 = vpop.f32.mrf.mxu0
        %v520 = vadd.f32 %v461, %v519
        %v521 = vpop.f32.mrf.mxu0
        %v522 = vadd.f32 %v461, %v521
        %523 = vmatmul.bf16.gmra.mxu0 %v438
        %v524 = vpop.f32.mrf.mxu0
        %v525 = vadd.f32 %v461, %v524
        %v526 = vpop.f32.mrf.mxu0
        %v527 = vadd.f32 %v461, %v526
        %528 = vmatmul.bf16.gmra.mxu0 %v439
        %v529 = vpop.f32.mrf.mxu0
        %v530 = vadd.f32 %v461, %v529
        %v531 = vpop.f32.mrf.mxu0
        %v532 = vadd.f32 %v461, %v531
        %533 = vmatmul.bf16.gmra.mxu0 %v440
        %v534 = vpop.f32.mrf.mxu0
        %v535 = vadd.f32 %v461, %v534
        %v536 = vpop.f32.mrf.mxu0
        %v537 = vadd.f32 %v461, %v536
        %538 = vmatmul.bf16.gmra.mxu0 %v441
        %v539 = vpop.f32.mrf.mxu0
        %v540 = vadd.f32 %v461, %v539
        %v541 = vpop.f32.mrf.mxu0
        %v542 = vadd.f32 %v461, %v541
        %543 = vmatmul.bf16.gmra.mxu0 %v442
        %v544 = vpop.f32.mrf.mxu0
        %v545 = vadd.f32 %v461, %v544
        %v546 = vpop.f32.mrf.mxu0
        %v547 = vadd.f32 %v461, %v546
        %548 = vmatmul.bf16.gmra.mxu0 %v443
        %v549 = vpop.f32.mrf.mxu0
        %v550 = vadd.f32 %v461, %v549
        %v551 = vpop.f32.mrf.mxu0
        %552 = vdwg.mxu0
        %v553 = vmax.f32 %v520, 0.0
        %v554 = vmax.f32 %v522, 0.0
        %v555 = vmax.f32 %v525, 0.0
        %v556 = vmax.f32 %v527, 0.0
        %v557 = vmax.f32 %v530, 0.0
        %v558 = vmax.f32 %v532, 0.0
        %v559 = vmax.f32 %v535, 0.0
        %v560 = vmax.f32 %v537, 0.0
        %v561 = vmax.f32 %v540, 0.0
        %v562 = vmax.f32 %v542, 0.0
        %v563 = vmax.f32 %v545, 0.0
        %v564 = vmax.f32 %v547, 0.0
        %v565 = vmax.f32 %v550, 0.0
        %v566 = vpack.c.bf16 %v554, %v553
        %v567 = vpack.c.bf16 %v556, %v555
        %v568 = vpack.c.bf16 %v558, %v557
        %v569 = vpack.c.bf16 %v560, %v559
        %v570 = vpack.c.bf16 %v562, %v561
        %v571 = vpack.c.bf16 %v564, %v563
        %v572 = vpack.c.bf16 %v565, %v565
        %s573 = scalar_lea.vmem [#allocation3], 512
        %v574 = vld [vmem:[%s573] sm:$0xff]
        %v575 = vld [vmem:[%s573 + $0x8] sm:$0xff]
        %v576 = vld [vmem:[%s573 + $0x10] sm:$0xff]
        %v577 = vld [vmem:[%s573 + $0x18] sm:$0xff]
        %v578 = vld [vmem:[%s573 + $0x20] sm:$0xff]
        %v579 = vld [vmem:[%s573 + $0x28] sm:$0xff]
        %v580 = vld [vmem:[%s573 + $0x30] sm:$0xff]
        %v581 = vld [vmem:[%s573 + $0x38] sm:$0xff]
        %v582 = vld [vmem:[%s573 + $0x40] sm:$0xff]
        %v583 = vld [vmem:[%s573 + $0x48] sm:$0xff]
        %v584 = vld [vmem:[%s573 + $0x50] sm:$0xff]
        %v585 = vld [vmem:[%s573 + $0x58] sm:$0xff]
        %v586 = vld [vmem:[%s573 + $0x60] sm:$0xff]
        %v587 = vld [vmem:[%s573 + $0x68] sm:$0xff]
        %v588 = vld [vmem:[%s573 + $0x70] sm:$0xff]
        %v589 = vld [vmem:[%s573 + $0x78] sm:$0xff]
        %s590 = scalar_lea.vmem %s2, 2
        %v591 = vld [vmem:[%s590] ss:$8 sm:$0x3]
        %v593 = vperm.slane %v591, 0
        %v594 = vperm.slane %v591, 1
        %v613 = vunpack.c.l.b16 %v574
        %v614 = vunpack.c.h.b16 %v574
        %v615 = vunpack.c.l.b16 %v575
        %v616 = vunpack.c.h.b16 %v575
        %v617 = vunpack.c.l.b16 %v576
        %v618 = vunpack.c.h.b16 %v576
        %v619 = vunpack.c.l.b16 %v577
        %v620 = vunpack.c.h.b16 %v577
        %v621 = vunpack.c.l.b16 %v578
        %v622 = vunpack.c.h.b16 %v578
        %v623 = vunpack.c.l.b16 %v579
        %v624 = vunpack.c.h.b16 %v579
        %v625 = vunpack.c.l.b16 %v580
        %v626 = vunpack.c.h.b16 %v580
        %v627 = vunpack.c.l.b16 %v581
        %v628 = vunpack.c.h.b16 %v581
        %v629 = vunpack.c.l.b16 %v582
        %v630 = vunpack.c.h.b16 %v582
        %v631 = vunpack.c.l.b16 %v583
        %v632 = vunpack.c.h.b16 %v583
        %v633 = vunpack.c.l.b16 %v584
        %v634 = vunpack.c.h.b16 %v584
        %v635 = vunpack.c.l.b16 %v585
        %v636 = vunpack.c.h.b16 %v585
        %v637 = vunpack.c.l.b16 %v586
        %v638 = vunpack.c.h.b16 %v586
        %v639 = vunpack.c.l.b16 %v587
        %v640 = vunpack.c.h.b16 %v587
        %v641 = vunpack.c.l.b16 %v588
        %v642 = vunpack.c.h.b16 %v588
        %v643 = vunpack.c.l.b16 %v589
        %v644 = vunpack.c.h.b16 %v589
        %v645 = vpack.c.b16 %v615, %v613
        %v646 = vpack.c.b16 %v616, %v614
        %v647 = vpack.c.b16 %v619, %v617
        %v648 = vpack.c.b16 %v620, %v618
        %v649 = vpack.c.b16 %v623, %v621
        %v650 = vpack.c.b16 %v624, %v622
        %v651 = vpack.c.b16 %v627, %v625
        %v652 = vpack.c.b16 %v628, %v626
        %v653 = vpack.c.b16 %v631, %v629
        %v654 = vpack.c.b16 %v632, %v630
        %v655 = vpack.c.b16 %v635, %v633
        %v656 = vpack.c.b16 %v636, %v634
        %v657 = vpack.c.b16 %v639, %v637
        %v658 = vpack.c.b16 %v640, %v638
        %v659 = vpack.c.b16 %v643, %v641
        %v660 = vpack.c.b16 %v644, %v642
        %677 = vmatpush.bf16.msra.mxu0 %v659
        %678 = vmatpush.bf16.msra.mxu0 %v657
        %679 = vmatpush.bf16.msra.mxu0 %v655
        %680 = vmatpush.bf16.msra.mxu0 %v653
        %681 = vmatpush.bf16.msra.mxu0 %v651
        %682 = vmatpush.bf16.msra.mxu0 %v649
        %683 = vmatpush.bf16.msra.mxu0 %v647
        %684 = vmatpush.bf16.msra.mxu0 %v645
        %685 = vmatmul.bf16.gmra.mxu0 %v566
        %v686 = vpop.f32.mrf.mxu0
        %v687 = vadd.f32 %v593, %v686
        %v688 = vpop.f32.mrf.mxu0
        %v689 = vadd.f32 %v593, %v688
        %690 = vmatmul.bf16.gmra.mxu0 %v567
        %v691 = vpop.f32.mrf.mxu0
        %v692 = vadd.f32 %v593, %v691
        %v693 = vpop.f32.mrf.mxu0
        %v694 = vadd.f32 %v593, %v693
        %695 = vmatmul.bf16.gmra.mxu0 %v568
        %v696 = vpop.f32.mrf.mxu0
        %v697 = vadd.f32 %v593, %v696
        %v698 = vpop.f32.mrf.mxu0
        %v699 = vadd.f32 %v593, %v698
        %700 = vmatmul.bf16.gmra.mxu0 %v569
        %v701 = vpop.f32.mrf.mxu0
        %v702 = vadd.f32 %v593, %v701
        %v703 = vpop.f32.mrf.mxu0
        %v704 = vadd.f32 %v593, %v703
        %705 = vmatmul.bf16.gmra.mxu0 %v570
        %v706 = vpop.f32.mrf.mxu0
        %v707 = vadd.f32 %v593, %v706
        %v708 = vpop.f32.mrf.mxu0
        %v709 = vadd.f32 %v593, %v708
        %710 = vmatmul.bf16.gmra.mxu0 %v571
        %v711 = vpop.f32.mrf.mxu0
        %v712 = vadd.f32 %v593, %v711
        %v713 = vpop.f32.mrf.mxu0
        %v714 = vadd.f32 %v593, %v713
        %715 = vmatmul.bf16.gmra.mxu0 %v572
        %v716 = vpop.f32.mrf.mxu0
        %v717 = vadd.f32 %v593, %v716
        %v718 = vpop.f32.mrf.mxu0
        %719 = vdwg.mxu0
        %720 = vmatpush.bf16.msra.mxu0 %v660
        %721 = vmatpush.bf16.msra.mxu0 %v658
        %722 = vmatpush.bf16.msra.mxu0 %v656
        %723 = vmatpush.bf16.msra.mxu0 %v654
        %724 = vmatpush.bf16.msra.mxu0 %v652
        %725 = vmatpush.bf16.msra.mxu0 %v650
        %726 = vmatpush.bf16.msra.mxu0 %v648
        %727 = vmatpush.bf16.msra.mxu0 %v646
        %728 = vmatmul.bf16.gmra.mxu0 %v566
        %v729 = vpop.f32.mrf.mxu0
        %v730 = vadd.f32 %v594, %v729
        %v731 = vpop.f32.mrf.mxu0
        %v732 = vadd.f32 %v594, %v731
        %733 = vmatmul.bf16.gmra.mxu0 %v567
        %v734 = vpop.f32.mrf.mxu0
        %v735 = vadd.f32 %v594, %v734
        %v736 = vpop.f32.mrf.mxu0
        %v737 = vadd.f32 %v594, %v736
        %738 = vmatmul.bf16.gmra.mxu0 %v568
        %v739 = vpop.f32.mrf.mxu0
        %v740 = vadd.f32 %v594, %v739
        %v741 = vpop.f32.mrf.mxu0
        %v742 = vadd.f32 %v594, %v741
        %743 = vmatmul.bf16.gmra.mxu0 %v569
        %v744 = vpop.f32.mrf.mxu0
        %v745 = vadd.f32 %v594, %v744
        %v746 = vpop.f32.mrf.mxu0
        %v747 = vadd.f32 %v594, %v746
        %748 = vmatmul.bf16.gmra.mxu0 %v570
        %v749 = vpop.f32.mrf.mxu0
        %v750 = vadd.f32 %v594, %v749
        %v751 = vpop.f32.mrf.mxu0
        %v752 = vadd.f32 %v594, %v751
        %753 = vmatmul.bf16.gmra.mxu0 %v571
        %v754 = vpop.f32.mrf.mxu0
        %v755 = vadd.f32 %v594, %v754
        %v756 = vpop.f32.mrf.mxu0
        %v757 = vadd.f32 %v594, %v756
        %758 = vmatmul.bf16.gmra.mxu0 %v572
        %v759 = vpop.f32.mrf.mxu0
        %v760 = vadd.f32 %v594, %v759
        %v761 = vpop.f32.mrf.mxu0
        %762 = vdwg.mxu0
        %v763 = vmax.f32 %v687, 0.0
        %v764 = vmax.f32 %v730, 0.0
        %v765 = vmax.f32 %v689, 0.0
        %v766 = vmax.f32 %v732, 0.0
        %v767 = vmax.f32 %v692, 0.0
        %v768 = vmax.f32 %v735, 0.0
        %v769 = vmax.f32 %v694, 0.0
        %v770 = vmax.f32 %v737, 0.0
        %v771 = vmax.f32 %v697, 0.0
        %v772 = vmax.f32 %v740, 0.0
        %v773 = vmax.f32 %v699, 0.0
        %v774 = vmax.f32 %v742, 0.0
        %v775 = vmax.f32 %v702, 0.0
        %v776 = vmax.f32 %v745, 0.0
        %v777 = vmax.f32 %v704, 0.0
        %v778 = vmax.f32 %v747, 0.0
        %v779 = vmax.f32 %v707, 0.0
        %v780 = vmax.f32 %v750, 0.0
        %v781 = vmax.f32 %v709, 0.0
        %v782 = vmax.f32 %v752, 0.0
        %v783 = vmax.f32 %v712, 0.0
        %v784 = vmax.f32 %v755, 0.0
        %v785 = vmax.f32 %v714, 0.0
        %v786 = vmax.f32 %v757, 0.0
        %v787 = vmax.f32 %v717, 0.0
        %v788 = vmax.f32 %v760, 0.0
        %v789 = vpack.c.bf16 %v765, %v763
        %v790 = vpack.c.bf16 %v766, %v764
        %v791 = vpack.c.bf16 %v769, %v767
        %v792 = vpack.c.bf16 %v770, %v768
        %v793 = vpack.c.bf16 %v773, %v771
        %v794 = vpack.c.bf16 %v774, %v772
        %v795 = vpack.c.bf16 %v777, %v775
        %v796 = vpack.c.bf16 %v778, %v776
        %v797 = vpack.c.bf16 %v781, %v779
        %v798 = vpack.c.bf16 %v782, %v780
        %v799 = vpack.c.bf16 %v785, %v783
        %v800 = vpack.c.bf16 %v786, %v784
        %v801 = vpack.c.bf16 %v787, %v787
        %v802 = vpack.c.bf16 %v788, %v788
        %s803 = scalar_lea.vmem [#allocation3], 768
        %v804 = vld [vmem:[%s803] sm:$0xff]
        %v805 = vld [vmem:[%s803 + $0x8] sm:$0xff]
        %v806 = vld [vmem:[%s803 + $0x10] sm:$0xff]
        %v807 = vld [vmem:[%s803 + $0x18] sm:$0xff]
        %v808 = vld [vmem:[%s803 + $0x20] sm:$0xff]
        %v809 = vld [vmem:[%s803 + $0x28] sm:$0xff]
        %v810 = vld [vmem:[%s803 + $0x30] sm:$0xff]
        %v811 = vld [vmem:[%s803 + $0x38] sm:$0xff]
        %v812 = vld [vmem:[%s803 + $0x40] sm:$0xff]
        %v813 = vld [vmem:[%s803 + $0x48] sm:$0xff]
        %v814 = vld [vmem:[%s803 + $0x50] sm:$0xff]
        %v815 = vld [vmem:[%s803 + $0x58] sm:$0xff]
        %v816 = vld [vmem:[%s803 + $0x60] sm:$0xff]
        %v817 = vld [vmem:[%s803 + $0x68] sm:$0xff]
        %v818 = vld [vmem:[%s803 + $0x70] sm:$0xff]
        %v819 = vld [vmem:[%s803 + $0x78] sm:$0xff]
        %v820 = vld [vmem:[%s803 + $0x80] sm:$0xff]
        %v821 = vld [vmem:[%s803 + $0x88] sm:$0xff]
        %v822 = vld [vmem:[%s803 + $0x90] sm:$0xff]
        %v823 = vld [vmem:[%s803 + $0x98] sm:$0xff]
        %v824 = vld [vmem:[%s803 + $0xa0] sm:$0xff]
        %v825 = vld [vmem:[%s803 + $0xa8] sm:$0xff]
        %v826 = vld [vmem:[%s803 + $0xb0] sm:$0xff]
        %v827 = vld [vmem:[%s803 + $0xb8] sm:$0xff]
        %v828 = vld [vmem:[%s803 + $0xc0] sm:$0xff]
        %v829 = vld [vmem:[%s803 + $0xc8] sm:$0xff]
        %v830 = vld [vmem:[%s803 + $0xd0] sm:$0xff]
        %v831 = vld [vmem:[%s803 + $0xd8] sm:$0xff]
        %v832 = vld [vmem:[%s803 + $0xe0] sm:$0xff]
        %v833 = vld [vmem:[%s803 + $0xe8] sm:$0xff]
        %v834 = vld [vmem:[%s803 + $0xf0] sm:$0xff]
        %v835 = vld [vmem:[%s803 + $0xf8] sm:$0xff]
        %s836 = scalar_lea.vmem %s2, 3
        %v837 = vld [vmem:[%s836] ss:$8 sm:$0x3]
        %v839 = vperm.slane %v837, 0
        %v840 = vperm.slane %v837, 1
        %v875 = vunpack.c.l.b16 %v804
        %v876 = vunpack.c.h.b16 %v804
        %v877 = vunpack.c.l.b16 %v805
        %v878 = vunpack.c.h.b16 %v805
        %v879 = vunpack.c.l.b16 %v806
        %v880 = vunpack.c.h.b16 %v806
        %v881 = vunpack.c.l.b16 %v807
        %v882 = vunpack.c.h.b16 %v807
        %v883 = vunpack.c.l.b16 %v808
        %v884 = vunpack.c.h.b16 %v808
        %v885 = vunpack.c.l.b16 %v809
        %v886 = vunpack.c.h.b16 %v809
        %v887 = vunpack.c.l.b16 %v810
        %v888 = vunpack.c.h.b16 %v810
        %v889 = vunpack.c.l.b16 %v811
        %v890 = vunpack.c.h.b16 %v811
        %v891 = vunpack.c.l.b16 %v812
        %v892 = vunpack.c.h.b16 %v812
        %v893 = vunpack.c.l.b16 %v813
        %v894 = vunpack.c.h.b16 %v813
        %v895 = vunpack.c.l.b16 %v814
        %v896 = vunpack.c.h.b16 %v814
        %v897 = vunpack.c.l.b16 %v815
        %v898 = vunpack.c.h.b16 %v815
        %v899 = vunpack.c.l.b16 %v816
        %v900 = vunpack.c.h.b16 %v816
        %v901 = vunpack.c.l.b16 %v817
        %v902 = vunpack.c.h.b16 %v817
        %v903 = vunpack.c.l.b16 %v818
        %v904 = vunpack.c.h.b16 %v818
        %v905 = vunpack.c.l.b16 %v819
        %v906 = vunpack.c.h.b16 %v819
        %v907 = vunpack.c.l.b16 %v820
        %v908 = vunpack.c.h.b16 %v820
        %v909 = vunpack.c.l.b16 %v821
        %v910 = vunpack.c.h.b16 %v821
        %v911 = vunpack.c.l.b16 %v822
        %v912 = vunpack.c.h.b16 %v822
        %v913 = vunpack.c.l.b16 %v823
        %v914 = vunpack.c.h.b16 %v823
        %v915 = vunpack.c.l.b16 %v824
        %v916 = vunpack.c.h.b16 %v824
        %v917 = vunpack.c.l.b16 %v825
        %v918 = vunpack.c.h.b16 %v825
        %v919 = vunpack.c.l.b16 %v826
        %v920 = vunpack.c.h.b16 %v826
        %v921 = vunpack.c.l.b16 %v827
        %v922 = vunpack.c.h.b16 %v827
        %v923 = vunpack.c.l.b16 %v828
        %v924 = vunpack.c.h.b16 %v828
        %v925 = vunpack.c.l.b16 %v829
        %v926 = vunpack.c.h.b16 %v829
        %v927 = vunpack.c.l.b16 %v830
        %v928 = vunpack.c.h.b16 %v830
        %v929 = vunpack.c.l.b16 %v831
        %v930 = vunpack.c.h.b16 %v831
        %v931 = vunpack.c.l.b16 %v832
        %v932 = vunpack.c.h.b16 %v832
        %v933 = vunpack.c.l.b16 %v833
        %v934 = vunpack.c.h.b16 %v833
        %v935 = vunpack.c.l.b16 %v834
        %v936 = vunpack.c.h.b16 %v834
        %v937 = vunpack.c.l.b16 %v835
        %v938 = vunpack.c.h.b16 %v835
        %v939 = vpack.c.b16 %v877, %v875
        %v940 = vpack.c.b16 %v878, %v876
        %v941 = vpack.c.b16 %v881, %v879
        %v942 = vpack.c.b16 %v882, %v880
        %v943 = vpack.c.b16 %v885, %v883
        %v944 = vpack.c.b16 %v886, %v884
        %v945 = vpack.c.b16 %v889, %v887
        %v946 = vpack.c.b16 %v890, %v888
        %v947 = vpack.c.b16 %v893, %v891
        %v948 = vpack.c.b16 %v894, %v892
        %v949 = vpack.c.b16 %v897, %v895
        %v950 = vpack.c.b16 %v898, %v896
        %v951 = vpack.c.b16 %v901, %v899
        %v952 = vpack.c.b16 %v902, %v900
        %v953 = vpack.c.b16 %v905, %v903
        %v954 = vpack.c.b16 %v906, %v904
        %v955 = vpack.c.b16 %v909, %v907
        %v956 = vpack.c.b16 %v910, %v908
        %v957 = vpack.c.b16 %v913, %v911
        %v958 = vpack.c.b16 %v914, %v912
        %v959 = vpack.c.b16 %v917, %v915
        %v960 = vpack.c.b16 %v918, %v916
        %v961 = vpack.c.b16 %v921, %v919
        %v962 = vpack.c.b16 %v922, %v920
        %v963 = vpack.c.b16 %v925, %v923
        %v964 = vpack.c.b16 %v926, %v924
        %v965 = vpack.c.b16 %v929, %v927
        %v966 = vpack.c.b16 %v930, %v928
        %v967 = vpack.c.b16 %v933, %v931
        %v968 = vpack.c.b16 %v934, %v932
        %v969 = vpack.c.b16 %v937, %v935
        %v970 = vpack.c.b16 %v938, %v936
        %1003 = vmatpush.bf16.msra.mxu0 %v953
        %1004 = vmatpush.bf16.msra.mxu0 %v951
        %1005 = vmatpush.bf16.msra.mxu0 %v949
        %1006 = vmatpush.bf16.msra.mxu0 %v947
        %1007 = vmatpush.bf16.msra.mxu0 %v945
        %1008 = vmatpush.bf16.msra.mxu0 %v943
        %1009 = vmatpush.bf16.msra.mxu0 %v941
        %1010 = vmatpush.bf16.msra.mxu0 %v939
        %1011 = vmatmul.bf16.gmra.mxu0 %v789
        %v1012 = vpop.f32.mrf.mxu0
        %v1013 = vadd.f32 %v839, %v1012
        %v1014 = vpop.f32.mrf.mxu0
        %v1015 = vadd.f32 %v839, %v1014
        %1016 = vmatmul.bf16.gmra.mxu0 %v791
        %v1017 = vpop.f32.mrf.mxu0
        %v1018 = vadd.f32 %v839, %v1017
        %v1019 = vpop.f32.mrf.mxu0
        %v1020 = vadd.f32 %v839, %v1019
        %1021 = vmatmul.bf16.gmra.mxu0 %v793
        %v1022 = vpop.f32.mrf.mxu0
        %v1023 = vadd.f32 %v839, %v1022
        %v1024 = vpop.f32.mrf.mxu0
        %v1025 = vadd.f32 %v839, %v1024
        %1026 = vmatmul.bf16.gmra.mxu0 %v795
        %v1027 = vpop.f32.mrf.mxu0
        %v1028 = vadd.f32 %v839, %v1027
        %v1029 = vpop.f32.mrf.mxu0
        %v1030 = vadd.f32 %v839, %v1029
        %1031 = vmatmul.bf16.gmra.mxu0 %v797
        %v1032 = vpop.f32.mrf.mxu0
        %v1033 = vadd.f32 %v839, %v1032
        %v1034 = vpop.f32.mrf.mxu0
        %v1035 = vadd.f32 %v839, %v1034
        %1036 = vmatmul.bf16.gmra.mxu0 %v799
        %v1037 = vpop.f32.mrf.mxu0
        %v1038 = vadd.f32 %v839, %v1037
        %v1039 = vpop.f32.mrf.mxu0
        %v1040 = vadd.f32 %v839, %v1039
        %1041 = vmatmul.bf16.gmra.mxu0 %v801
        %v1042 = vpop.f32.mrf.mxu0
        %v1043 = vadd.f32 %v839, %v1042
        %v1044 = vpop.f32.mrf.mxu0
        %1045 = vdwg.mxu0
        %1046 = vmatpush.bf16.msra.mxu0 %v969
        %1047 = vmatpush.bf16.msra.mxu0 %v967
        %1048 = vmatpush.bf16.msra.mxu0 %v965
        %1049 = vmatpush.bf16.msra.mxu0 %v963
        %1050 = vmatpush.bf16.msra.mxu0 %v961
        %1051 = vmatpush.bf16.msra.mxu0 %v959
        %1052 = vmatpush.bf16.msra.mxu0 %v957
        %1053 = vmatpush.bf16.msra.mxu0 %v955
        %1054 = vmatmul.bf16.gmra.mxu0 %v790
        %v1055 = vpop.f32.mrf.mxu0
        %v1056 = vadd.f32 %v1013, %v1055
        %v1057 = vpop.f32.mrf.mxu0
        %v1058 = vadd.f32 %v1015, %v1057
        %1059 = vmatmul.bf16.gmra.mxu0 %v792
        %v1060 = vpop.f32.mrf.mxu0
        %v1061 = vadd.f32 %v1018, %v1060
        %v1062 = vpop.f32.mrf.mxu0
        %v1063 = vadd.f32 %v1020, %v1062
        %1064 = vmatmul.bf16.gmra.mxu0 %v794
        %v1065 = vpop.f32.mrf.mxu0
        %v1066 = vadd.f32 %v1023, %v1065
        %v1067 = vpop.f32.mrf.mxu0
        %v1068 = vadd.f32 %v1025, %v1067
        %1069 = vmatmul.bf16.gmra.mxu0 %v796
        %v1070 = vpop.f32.mrf.mxu0
        %v1071 = vadd.f32 %v1028, %v1070
        %v1072 = vpop.f32.mrf.mxu0
        %v1073 = vadd.f32 %v1030, %v1072
        %1074 = vmatmul.bf16.gmra.mxu0 %v798
        %v1075 = vpop.f32.mrf.mxu0
        %v1076 = vadd.f32 %v1033, %v1075
        %v1077 = vpop.f32.mrf.mxu0
        %v1078 = vadd.f32 %v1035, %v1077
        %1079 = vmatmul.bf16.gmra.mxu0 %v800
        %v1080 = vpop.f32.mrf.mxu0
        %v1081 = vadd.f32 %v1038, %v1080
        %v1082 = vpop.f32.mrf.mxu0
        %v1083 = vadd.f32 %v1040, %v1082
        %1084 = vmatmul.bf16.gmra.mxu0 %v802
        %v1085 = vpop.f32.mrf.mxu0
        %v1086 = vadd.f32 %v1043, %v1085
        %v1087 = vpop.f32.mrf.mxu0
        %1088 = vdwg.mxu0
        %1089 = vmatpush.bf16.msra.mxu0 %v954
        %1090 = vmatpush.bf16.msra.mxu0 %v952
        %1091 = vmatpush.bf16.msra.mxu0 %v950
        %1092 = vmatpush.bf16.msra.mxu0 %v948
        %1093 = vmatpush.bf16.msra.mxu0 %v946
        %1094 = vmatpush.bf16.msra.mxu0 %v944
        %1095 = vmatpush.bf16.msra.mxu0 %v942
        %1096 = vmatpush.bf16.msra.mxu0 %v940
        %1097 = vmatmul.bf16.gmra.mxu0 %v789
        %v1098 = vpop.f32.mrf.mxu0
        %v1099 = vadd.f32 %v840, %v1098
        %v1100 = vpop.f32.mrf.mxu0
        %v1101 = vadd.f32 %v840, %v1100
        %1102 = vmatmul.bf16.gmra.mxu0 %v791
        %v1103 = vpop.f32.mrf.mxu0
        %v1104 = vadd.f32 %v840, %v1103
        %v1105 = vpop.f32.mrf.mxu0
        %v1106 = vadd.f32 %v840, %v1105
        %1107 = vmatmul.bf16.gmra.mxu0 %v793
        %v1108 = vpop.f32.mrf.mxu0
        %v1109 = vadd.f32 %v840, %v1108
        %v1110 = vpop.f32.mrf.mxu0
        %v1111 = vadd.f32 %v840, %v1110
        %1112 = vmatmul.bf16.gmra.mxu0 %v795
        %v1113 = vpop.f32.mrf.mxu0
        %v1114 = vadd.f32 %v840, %v1113
        %v1115 = vpop.f32.mrf.mxu0
        %v1116 = vadd.f32 %v840, %v1115
        %1117 = vmatmul.bf16.gmra.mxu0 %v797
        %v1118 = vpop.f32.mrf.mxu0
        %v1119 = vadd.f32 %v840, %v1118
        %v1120 = vpop.f32.mrf.mxu0
        %v1121 = vadd.f32 %v840, %v1120
        %1122 = vmatmul.bf16.gmra.mxu0 %v799
        %v1123 = vpop.f32.mrf.mxu0
        %v1124 = vadd.f32 %v840, %v1123
        %v1125 = vpop.f32.mrf.mxu0
        %v1126 = vadd.f32 %v840, %v1125
        %1127 = vmatmul.bf16.gmra.mxu0 %v801
        %v1128 = vpop.f32.mrf.mxu0
        %v1129 = vadd.f32 %v840, %v1128
        %v1130 = vpop.f32.mrf.mxu0
        %1131 = vdwg.mxu0
        %1132 = vmatpush.bf16.msra.mxu0 %v970
        %1133 = vmatpush.bf16.msra.mxu0 %v968
        %1134 = vmatpush.bf16.msra.mxu0 %v966
        %1135 = vmatpush.bf16.msra.mxu0 %v964
        %1136 = vmatpush.bf16.msra.mxu0 %v962
        %1137 = vmatpush.bf16.msra.mxu0 %v960
        %1138 = vmatpush.bf16.msra.mxu0 %v958
        %1139 = vmatpush.bf16.msra.mxu0 %v956
        %1140 = vmatmul.bf16.gmra.mxu0 %v790
        %v1141 = vpop.f32.mrf.mxu0
        %v1142 = vadd.f32 %v1099, %v1141
        %v1143 = vpop.f32.mrf.mxu0
        %v1144 = vadd.f32 %v1101, %v1143
        %1145 = vmatmul.bf16.gmra.mxu0 %v792
        %v1146 = vpop.f32.mrf.mxu0
        %v1147 = vadd.f32 %v1104, %v1146
        %v1148 = vpop.f32.mrf.mxu0
        %v1149 = vadd.f32 %v1106, %v1148
        %1150 = vmatmul.bf16.gmra.mxu0 %v794
        %v1151 = vpop.f32.mrf.mxu0
        %v1152 = vadd.f32 %v1109, %v1151
        %v1153 = vpop.f32.mrf.mxu0
        %v1154 = vadd.f32 %v1111, %v1153
        %1155 = vmatmul.bf16.gmra.mxu0 %v796
        %v1156 = vpop.f32.mrf.mxu0
        %v1157 = vadd.f32 %v1114, %v1156
        %v1158 = vpop.f32.mrf.mxu0
        %v1159 = vadd.f32 %v1116, %v1158
        %1160 = vmatmul.bf16.gmra.mxu0 %v798
        %v1161 = vpop.f32.mrf.mxu0
        %v1162 = vadd.f32 %v1119, %v1161
        %v1163 = vpop.f32.mrf.mxu0
        %v1164 = vadd.f32 %v1121, %v1163
        %1165 = vmatmul.bf16.gmra.mxu0 %v800
        %v1166 = vpop.f32.mrf.mxu0
        %v1167 = vadd.f32 %v1124, %v1166
        %v1168 = vpop.f32.mrf.mxu0
        %v1169 = vadd.f32 %v1126, %v1168
        %1170 = vmatmul.bf16.gmra.mxu0 %v802
        %v1171 = vpop.f32.mrf.mxu0
        %v1172 = vadd.f32 %v1129, %v1171
        %v1173 = vpop.f32.mrf.mxu0
        %1174 = vdwg.mxu0
        %v1175 = vmax.f32 %v1056, 0.0
        %v1176 = vmax.f32 %v1142, 0.0
        %v1177 = vmax.f32 %v1058, 0.0
        %v1178 = vmax.f32 %v1144, 0.0
        %v1179 = vmax.f32 %v1061, 0.0
        %v1180 = vmax.f32 %v1147, 0.0
        %v1181 = vmax.f32 %v1063, 0.0
        %v1182 = vmax.f32 %v1149, 0.0
        %v1183 = vmax.f32 %v1066, 0.0
        %v1184 = vmax.f32 %v1152, 0.0
        %v1185 = vmax.f32 %v1068, 0.0
        %v1186 = vmax.f32 %v1154, 0.0
        %v1187 = vmax.f32 %v1071, 0.0
        %v1188 = vmax.f32 %v1157, 0.0
        %v1189 = vmax.f32 %v1073, 0.0
        %v1190 = vmax.f32 %v1159, 0.0
        %v1191 = vmax.f32 %v1076, 0.0
        %v1192 = vmax.f32 %v1162, 0.0
        %v1193 = vmax.f32 %v1078, 0.0
        %v1194 = vmax.f32 %v1164, 0.0
        %v1195 = vmax.f32 %v1081, 0.0
        %v1196 = vmax.f32 %v1167, 0.0
        %v1197 = vmax.f32 %v1083, 0.0
        %v1198 = vmax.f32 %v1169, 0.0
        %v1199 = vmax.f32 %v1086, 0.0
        %v1200 = vmax.f32 %v1172, 0.0
        %v1201 = vpack.c.bf16 %v1177, %v1175
        %v1202 = vpack.c.bf16 %v1178, %v1176
        %v1203 = vpack.c.bf16 %v1181, %v1179
        %v1204 = vpack.c.bf16 %v1182, %v1180
        %v1205 = vpack.c.bf16 %v1185, %v1183
        %v1206 = vpack.c.bf16 %v1186, %v1184
        %v1207 = vpack.c.bf16 %v1189, %v1187
        %v1208 = vpack.c.bf16 %v1190, %v1188
        %v1209 = vpack.c.bf16 %v1193, %v1191
        %v1210 = vpack.c.bf16 %v1194, %v1192
        %v1211 = vpack.c.bf16 %v1197, %v1195
        %v1212 = vpack.c.bf16 %v1198, %v1196
        %v1213 = vpack.c.bf16 %v1199, %v1199
        %v1214 = vpack.c.bf16 %v1200, %v1200
        %s1215 = scalar_lea.vmem [#allocation3], 1024
        %v1216 = vld [vmem:[%s1215] sm:$0xf]
        %v1217 = vld [vmem:[%s1215 + $0x8] sm:$0xf]
        %v1218 = vld [vmem:[%s1215 + $0x10] sm:$0xf]
        %v1219 = vld [vmem:[%s1215 + $0x18] sm:$0xf]
        %v1220 = vld [vmem:[%s1215 + $0x20] sm:$0xf]
        %v1221 = vld [vmem:[%s1215 + $0x28] sm:$0xf]
        %v1222 = vld [vmem:[%s1215 + $0x30] sm:$0xf]
        %v1223 = vld [vmem:[%s1215 + $0x38] sm:$0xf]
        %v1224 = vld [vmem:[%s1215 + $0x40] sm:$0xf]
        %v1225 = vld [vmem:[%s1215 + $0x48] sm:$0xf]
        %v1226 = vld [vmem:[%s1215 + $0x50] sm:$0xf]
        %v1227 = vld [vmem:[%s1215 + $0x58] sm:$0xf]
        %v1228 = vld [vmem:[%s1215 + $0x60] sm:$0xf]
        %v1229 = vld [vmem:[%s1215 + $0x68] sm:$0xf]
        %v1230 = vld [vmem:[%s1215 + $0x70] sm:$0xf]
        %v1231 = vld [vmem:[%s1215 + $0x78] sm:$0xf]
        %v1232 = vld [vmem:[%s1215 + $0x80] sm:$0xf]
        %v1233 = vld [vmem:[%s1215 + $0x88] sm:$0xf]
        %v1234 = vld [vmem:[%s1215 + $0x90] sm:$0xf]
        %v1235 = vld [vmem:[%s1215 + $0x98] sm:$0xf]
        %v1236 = vld [vmem:[%s1215 + $0xa0] sm:$0xf]
        %v1237 = vld [vmem:[%s1215 + $0xa8] sm:$0xf]
        %v1238 = vld [vmem:[%s1215 + $0xb0] sm:$0xf]
        %v1239 = vld [vmem:[%s1215 + $0xb8] sm:$0xf]
        %v1240 = vld [vmem:[%s1215 + $0xc0] sm:$0xf]
        %v1241 = vld [vmem:[%s1215 + $0xc8] sm:$0xf]
        %v1242 = vld [vmem:[%s1215 + $0xd0] sm:$0xf]
        %v1243 = vld [vmem:[%s1215 + $0xd8] sm:$0xf]
        %v1244 = vld [vmem:[%s1215 + $0xe0] sm:$0xf]
        %v1245 = vld [vmem:[%s1215 + $0xe8] sm:$0xf]
        %v1246 = vld [vmem:[%s1215 + $0xf0] sm:$0xf]
        %v1247 = vld [vmem:[%s1215 + $0xf8] sm:$0xf]
        %v1248 = vld [vmem:[%s2 + $0x4] ss:$0 sm:$0xff]
        %v1281 = vunpack.c.l.b16 %v1216
        %v1282 = vunpack.c.l.b16 %v1217
        %v1283 = vunpack.c.l.b16 %v1218
        %v1284 = vunpack.c.l.b16 %v1219
        %v1285 = vunpack.c.l.b16 %v1220
        %v1286 = vunpack.c.l.b16 %v1221
        %v1287 = vunpack.c.l.b16 %v1222
        %v1288 = vunpack.c.l.b16 %v1223
        %v1289 = vunpack.c.l.b16 %v1224
        %v1290 = vunpack.c.l.b16 %v1225
        %v1291 = vunpack.c.l.b16 %v1226
        %v1292 = vunpack.c.l.b16 %v1227
        %v1293 = vunpack.c.l.b16 %v1228
        %v1294 = vunpack.c.l.b16 %v1229
        %v1295 = vunpack.c.l.b16 %v1230
        %v1296 = vunpack.c.l.b16 %v1231
        %v1297 = vunpack.c.l.b16 %v1232
        %v1298 = vunpack.c.l.b16 %v1233
        %v1299 = vunpack.c.l.b16 %v1234
        %v1300 = vunpack.c.l.b16 %v1235
        %v1301 = vunpack.c.l.b16 %v1236
        %v1302 = vunpack.c.l.b16 %v1237
        %v1303 = vunpack.c.l.b16 %v1238
        %v1304 = vunpack.c.l.b16 %v1239
        %v1305 = vunpack.c.l.b16 %v1240
        %v1306 = vunpack.c.l.b16 %v1241
        %v1307 = vunpack.c.l.b16 %v1242
        %v1308 = vunpack.c.l.b16 %v1243
        %v1309 = vunpack.c.l.b16 %v1244
        %v1310 = vunpack.c.l.b16 %v1245
        %v1311 = vunpack.c.l.b16 %v1246
        %v1312 = vunpack.c.l.b16 %v1247
        %v1313 = vpack.c.b16 %v1282, %v1281
        %v1314 = vpack.c.b16 %v1284, %v1283
        %v1315 = vpack.c.b16 %v1286, %v1285
        %v1316 = vpack.c.b16 %v1288, %v1287
        %v1317 = vpack.c.b16 %v1290, %v1289
        %v1318 = vpack.c.b16 %v1292, %v1291
        %v1319 = vpack.c.b16 %v1294, %v1293
        %v1320 = vpack.c.b16 %v1296, %v1295
        %v1321 = vpack.c.b16 %v1298, %v1297
        %v1322 = vpack.c.b16 %v1300, %v1299
        %v1323 = vpack.c.b16 %v1302, %v1301
        %v1324 = vpack.c.b16 %v1304, %v1303
        %v1325 = vpack.c.b16 %v1306, %v1305
        %v1326 = vpack.c.b16 %v1308, %v1307
        %v1327 = vpack.c.b16 %v1310, %v1309
        %v1328 = vpack.c.b16 %v1312, %v1311
        %1345 = vmatpush.bf16.msra.mxu0 %v1320
        %1346 = vmatpush.bf16.msra.mxu0 %v1319
        %1347 = vmatpush.bf16.msra.mxu0 %v1318
        %1348 = vmatpush.bf16.msra.mxu0 %v1317
        %1349 = vmatpush.bf16.msra.mxu0 %v1316
        %1350 = vmatpush.bf16.msra.mxu0 %v1315
        %1351 = vmatpush.bf16.msra.mxu0 %v1314
        %1352 = vmatpush.bf16.msra.mxu0 %v1313
        %1353 = vmatmul.bf16.gmra.mxu0 %v1201
        %v1354 = vpop.f32.mrf.mxu0
        %v1355 = vadd.f32 %v1248, %v1354
        %v1356 = vpop.f32.mrf.mxu0
        %v1357 = vadd.f32 %v1248, %v1356
        %1358 = vmatmul.bf16.gmra.mxu0 %v1203
        %v1359 = vpop.f32.mrf.mxu0
        %v1360 = vadd.f32 %v1248, %v1359
        %v1361 = vpop.f32.mrf.mxu0
        %v1362 = vadd.f32 %v1248, %v1361
        %1363 = vmatmul.bf16.gmra.mxu0 %v1205
        %v1364 = vpop.f32.mrf.mxu0
        %v1365 = vadd.f32 %v1248, %v1364
        %v1366 = vpop.f32.mrf.mxu0
        %v1367 = vadd.f32 %v1248, %v1366
        %1368 = vmatmul.bf16.gmra.mxu0 %v1207
        %v1369 = vpop.f32.mrf.mxu0
        %v1370 = vadd.f32 %v1248, %v1369
        %v1371 = vpop.f32.mrf.mxu0
        %v1372 = vadd.f32 %v1248, %v1371
        %1373 = vmatmul.bf16.gmra.mxu0 %v1209
        %v1374 = vpop.f32.mrf.mxu0
        %v1375 = vadd.f32 %v1248, %v1374
        %v1376 = vpop.f32.mrf.mxu0
        %v1377 = vadd.f32 %v1248, %v1376
        %1378 = vmatmul.bf16.gmra.mxu0 %v1211
        %v1379 = vpop.f32.mrf.mxu0
        %v1380 = vadd.f32 %v1248, %v1379
        %v1381 = vpop.f32.mrf.mxu0
        %v1382 = vadd.f32 %v1248, %v1381
        %1383 = vmatmul.bf16.gmra.mxu0 %v1213
        %v1384 = vpop.f32.mrf.mxu0
        %v1385 = vadd.f32 %v1248, %v1384
        %v1386 = vpop.f32.mrf.mxu0
        %1387 = vdwg.mxu0
        %1388 = vmatpush.bf16.msra.mxu0 %v1328
        %1389 = vmatpush.bf16.msra.mxu0 %v1327
        %1390 = vmatpush.bf16.msra.mxu0 %v1326
        %1391 = vmatpush.bf16.msra.mxu0 %v1325
        %1392 = vmatpush.bf16.msra.mxu0 %v1324
        %1393 = vmatpush.bf16.msra.mxu0 %v1323
        %1394 = vmatpush.bf16.msra.mxu0 %v1322
        %1395 = vmatpush.bf16.msra.mxu0 %v1321
        %1396 = vmatmul.bf16.gmra.mxu0 %v1202
        %v1397 = vpop.f32.mrf.mxu0
        %v1398 = vadd.f32 %v1355, %v1397
        %v1399 = vpop.f32.mrf.mxu0
        %v1400 = vadd.f32 %v1357, %v1399
        %1401 = vmatmul.bf16.gmra.mxu0 %v1204
        %v1402 = vpop.f32.mrf.mxu0
        %v1403 = vadd.f32 %v1360, %v1402
        %v1404 = vpop.f32.mrf.mxu0
        %v1405 = vadd.f32 %v1362, %v1404
        %1406 = vmatmul.bf16.gmra.mxu0 %v1206
        %v1407 = vpop.f32.mrf.mxu0
        %v1408 = vadd.f32 %v1365, %v1407
        %v1409 = vpop.f32.mrf.mxu0
        %v1410 = vadd.f32 %v1367, %v1409
        %1411 = vmatmul.bf16.gmra.mxu0 %v1208
        %v1412 = vpop.f32.mrf.mxu0
        %v1413 = vadd.f32 %v1370, %v1412
        %v1414 = vpop.f32.mrf.mxu0
        %v1415 = vadd.f32 %v1372, %v1414
        %1416 = vmatmul.bf16.gmra.mxu0 %v1210
        %v1417 = vpop.f32.mrf.mxu0
        %v1418 = vadd.f32 %v1375, %v1417
        %v1419 = vpop.f32.mrf.mxu0
        %v1420 = vadd.f32 %v1377, %v1419
        %1421 = vmatmul.bf16.gmra.mxu0 %v1212
        %v1422 = vpop.f32.mrf.mxu0
        %v1423 = vadd.f32 %v1380, %v1422
        %v1424 = vpop.f32.mrf.mxu0
        %v1425 = vadd.f32 %v1382, %v1424
        %1426 = vmatmul.bf16.gmra.mxu0 %v1214
        %v1427 = vpop.f32.mrf.mxu0
        %v1428 = vadd.f32 %v1385, %v1427
        %v1429 = vpop.f32.mrf.mxu0
        %1430 = vdwg.mxu0
        %v1431 = vmax.f32 %v1398, 0.0
        %v1432 = vmax.f32 %v1400, 0.0
        %v1433 = vmax.f32 %v1403, 0.0
        %v1434 = vmax.f32 %v1405, 0.0
        %v1435 = vmax.f32 %v1408, 0.0
        %v1436 = vmax.f32 %v1410, 0.0
        %v1437 = vmax.f32 %v1413, 0.0
        %v1438 = vmax.f32 %v1415, 0.0
        %v1439 = vmax.f32 %v1418, 0.0
        %v1440 = vmax.f32 %v1420, 0.0
        %v1441 = vmax.f32 %v1423, 0.0
        %v1442 = vmax.f32 %v1425, 0.0
        %v1443 = vmax.f32 %v1428, 0.0
        %v1444 = vpack.c.bf16 %v1432, %v1431
        %v1445 = vpack.c.bf16 %v1434, %v1433
        %v1446 = vpack.c.bf16 %v1436, %v1435
        %v1447 = vpack.c.bf16 %v1438, %v1437
        %v1448 = vpack.c.bf16 %v1440, %v1439
        %v1449 = vpack.c.bf16 %v1442, %v1441
        %v1450 = vpack.c.bf16 %v1443, %v1443
        %s1451 = scalar_lea.vmem [#allocation3], 1280
        %v1452 = vld [vmem:[%s1451] sm:$0xf]
        %v1453 = vld [vmem:[%s1451 + $0x8] sm:$0xf]
        %v1454 = vld [vmem:[%s1451 + $0x10] sm:$0xf]
        %v1455 = vld [vmem:[%s1451 + $0x18] sm:$0xf]
        %v1456 = vld [vmem:[%s1451 + $0x20] sm:$0xf]
        %v1457 = vld [vmem:[%s1451 + $0x28] sm:$0xf]
        %v1458 = vld [vmem:[%s1451 + $0x30] sm:$0xf]
        %v1459 = vld [vmem:[%s1451 + $0x38] sm:$0xf]
        %v1460 = vld [vmem:[%s1451 + $0x40] sm:$0xf]
        %v1461 = vld [vmem:[%s1451 + $0x48] sm:$0xf]
        %v1462 = vld [vmem:[%s1451 + $0x50] sm:$0xf]
        %v1463 = vld [vmem:[%s1451 + $0x58] sm:$0xf]
        %v1464 = vld [vmem:[%s1451 + $0x60] sm:$0xf]
        %v1465 = vld [vmem:[%s1451 + $0x68] sm:$0xf]
        %v1466 = vld [vmem:[%s1451 + $0x70] sm:$0xf]
        %v1467 = vld [vmem:[%s1451 + $0x78] sm:$0xf]
        %v1468 = vld [vmem:[%s2 + $0x5] ss:$0 sm:$0xff]
        %v1485 = vunpack.c.l.b16 %v1452
        %v1486 = vunpack.c.l.b16 %v1453
        %v1487 = vunpack.c.l.b16 %v1454
        %v1488 = vunpack.c.l.b16 %v1455
        %v1489 = vunpack.c.l.b16 %v1456
        %v1490 = vunpack.c.l.b16 %v1457
        %v1491 = vunpack.c.l.b16 %v1458
        %v1492 = vunpack.c.l.b16 %v1459
        %v1493 = vunpack.c.l.b16 %v1460
        %v1494 = vunpack.c.l.b16 %v1461
        %v1495 = vunpack.c.l.b16 %v1462
        %v1496 = vunpack.c.l.b16 %v1463
        %v1497 = vunpack.c.l.b16 %v1464
        %v1498 = vunpack.c.l.b16 %v1465
        %v1499 = vunpack.c.l.b16 %v1466
        %v1500 = vunpack.c.l.b16 %v1467
        %v1501 = vpack.c.b16 %v1486, %v1485
        %v1502 = vpack.c.b16 %v1488, %v1487
        %v1503 = vpack.c.b16 %v1490, %v1489
        %v1504 = vpack.c.b16 %v1492, %v1491
        %v1505 = vpack.c.b16 %v1494, %v1493
        %v1506 = vpack.c.b16 %v1496, %v1495
        %v1507 = vpack.c.b16 %v1498, %v1497
        %v1508 = vpack.c.b16 %v1500, %v1499
        %1517 = vmatpush.bf16.msra.mxu0 %v1508
        %1518 = vmatpush.bf16.msra.mxu0 %v1507
        %1519 = vmatpush.bf16.msra.mxu0 %v1506
        %1520 = vmatpush.bf16.msra.mxu0 %v1505
        %1521 = vmatpush.bf16.msra.mxu0 %v1504
        %1522 = vmatpush.bf16.msra.mxu0 %v1503
        %1523 = vmatpush.bf16.msra.mxu0 %v1502
        %1524 = vmatpush.bf16.msra.mxu0 %v1501
        %1525 = vmatmul.bf16.gmra.mxu0 %v1444
        %v1526 = vpop.f32.mrf.mxu0
        %v1527 = vadd.f32 %v1468, %v1526
        %v1528 = vpop.f32.mrf.mxu0
        %v1529 = vadd.f32 %v1468, %v1528
        %1530 = vmatmul.bf16.gmra.mxu0 %v1445
        %v1531 = vpop.f32.mrf.mxu0
        %v1532 = vadd.f32 %v1468, %v1531
        %v1533 = vpop.f32.mrf.mxu0
        %v1534 = vadd.f32 %v1468, %v1533
        %1535 = vmatmul.bf16.gmra.mxu0 %v1446
        %v1536 = vpop.f32.mrf.mxu0
        %v1537 = vadd.f32 %v1468, %v1536
        %v1538 = vpop.f32.mrf.mxu0
        %v1539 = vadd.f32 %v1468, %v1538
        %1540 = vmatmul.bf16.gmra.mxu0 %v1447
        %v1541 = vpop.f32.mrf.mxu0
        %v1542 = vadd.f32 %v1468, %v1541
        %v1543 = vpop.f32.mrf.mxu0
        %v1544 = vadd.f32 %v1468, %v1543
        %1545 = vmatmul.bf16.gmra.mxu0 %v1448
        %v1546 = vpop.f32.mrf.mxu0
        %v1547 = vadd.f32 %v1468, %v1546
        %v1548 = vpop.f32.mrf.mxu0
        %v1549 = vadd.f32 %v1468, %v1548
        %1550 = vmatmul.bf16.gmra.mxu0 %v1449
        %v1551 = vpop.f32.mrf.mxu0
        %v1552 = vadd.f32 %v1468, %v1551
        %v1553 = vpop.f32.mrf.mxu0
        %v1554 = vadd.f32 %v1468, %v1553
        %1555 = vmatmul.bf16.gmra.mxu0 %v1450
        %v1556 = vpop.f32.mrf.mxu0
        %v1557 = vadd.f32 %v1468, %v1556
        %v1558 = vpop.f32.mrf.mxu0
        %1559 = vdwg.mxu0
        %v1560 = vmax.f32 %v1527, 0.0
        %v1561 = vmax.f32 %v1529, 0.0
        %v1562 = vmax.f32 %v1532, 0.0
        %v1563 = vmax.f32 %v1534, 0.0
        %v1564 = vmax.f32 %v1537, 0.0
        %v1565 = vmax.f32 %v1539, 0.0
        %v1566 = vmax.f32 %v1542, 0.0
        %v1567 = vmax.f32 %v1544, 0.0
        %v1568 = vmax.f32 %v1547, 0.0
        %v1569 = vmax.f32 %v1549, 0.0
        %v1570 = vmax.f32 %v1552, 0.0
        %v1571 = vmax.f32 %v1554, 0.0
        %v1572 = vmax.f32 %v1557, 0.0
        %v1573 = vpack.c.bf16 %v1561, %v1560
        %v1574 = vpack.c.bf16 %v1563, %v1562
        %v1575 = vpack.c.bf16 %v1565, %v1564
        %v1576 = vpack.c.bf16 %v1567, %v1566
        %v1577 = vpack.c.bf16 %v1569, %v1568
        %v1578 = vpack.c.bf16 %v1571, %v1570
        %v1579 = vpack.c.bf16 %v1572, %v1572
        %s1580 = scalar_lea.vmem [#allocation3], 1536
        %v1581 = vld [vmem:[%s1580] sm:$0xf]
        %v1582 = vld [vmem:[%s1580 + $0x8] sm:$0xf]
        %v1583 = vld [vmem:[%s1580 + $0x10] sm:$0xf]
        %v1584 = vld [vmem:[%s1580 + $0x18] sm:$0xf]
        %v1585 = vld [vmem:[%s1580 + $0x20] sm:$0xf]
        %v1586 = vld [vmem:[%s1580 + $0x28] sm:$0xf]
        %v1587 = vld [vmem:[%s1580 + $0x30] sm:$0xf]
        %v1588 = vld [vmem:[%s1580 + $0x38] sm:$0xf]
        %v1589 = vld [vmem:[%s1580 + $0x40] sm:$0xf]
        %v1590 = vld [vmem:[%s1580 + $0x48] sm:$0xf]
        %v1591 = vld [vmem:[%s1580 + $0x50] sm:$0xf]
        %v1592 = vld [vmem:[%s1580 + $0x58] sm:$0xf]
        %v1593 = vld [vmem:[%s1580 + $0x60] sm:$0xf]
        %v1594 = vld [vmem:[%s1580 + $0x68] sm:$0xf]
        %v1595 = vld [vmem:[%s1580 + $0x70] sm:$0xf]
        %v1596 = vld [vmem:[%s1580 + $0x78] sm:$0xf]
        %v1597 = vld [vmem:[%s2 + $0x6] ss:$0 sm:$0xff]
        %v1614 = vunpack.c.l.b16 %v1581
        %v1615 = vunpack.c.l.b16 %v1582
        %v1616 = vunpack.c.l.b16 %v1583
        %v1617 = vunpack.c.l.b16 %v1584
        %v1618 = vunpack.c.l.b16 %v1585
        %v1619 = vunpack.c.l.b16 %v1586
        %v1620 = vunpack.c.l.b16 %v1587
        %v1621 = vunpack.c.l.b16 %v1588
        %v1622 = vunpack.c.l.b16 %v1589
        %v1623 = vunpack.c.l.b16 %v1590
        %v1624 = vunpack.c.l.b16 %v1591
        %v1625 = vunpack.c.l.b16 %v1592
        %v1626 = vunpack.c.l.b16 %v1593
        %v1627 = vunpack.c.l.b16 %v1594
        %v1628 = vunpack.c.l.b16 %v1595
        %v1629 = vunpack.c.l.b16 %v1596
        %v1630 = vpack.c.b16 %v1615, %v1614
        %v1631 = vpack.c.b16 %v1617, %v1616
        %v1632 = vpack.c.b16 %v1619, %v1618
        %v1633 = vpack.c.b16 %v1621, %v1620
        %v1634 = vpack.c.b16 %v1623, %v1622
        %v1635 = vpack.c.b16 %v1625, %v1624
        %v1636 = vpack.c.b16 %v1627, %v1626
        %v1637 = vpack.c.b16 %v1629, %v1628
        %1646 = vmatpush.bf16.msra.mxu0 %v1637
        %1647 = vmatpush.bf16.msra.mxu0 %v1636
        %1648 = vmatpush.bf16.msra.mxu0 %v1635
        %1649 = vmatpush.bf16.msra.mxu0 %v1634
        %1650 = vmatpush.bf16.msra.mxu0 %v1633
        %1651 = vmatpush.bf16.msra.mxu0 %v1632
        %1652 = vmatpush.bf16.msra.mxu0 %v1631
        %1653 = vmatpush.bf16.msra.mxu0 %v1630
        %1654 = vmatmul.bf16.gmra.mxu0 %v1573
        %v1655 = vpop.f32.mrf.mxu0
        %v1656 = vadd.f32 %v1597, %v1655
        %v1657 = vpop.f32.mrf.mxu0
        %v1658 = vadd.f32 %v1597, %v1657
        %1659 = vmatmul.bf16.gmra.mxu0 %v1574
        %v1660 = vpop.f32.mrf.mxu0
        %v1661 = vadd.f32 %v1597, %v1660
        %v1662 = vpop.f32.mrf.mxu0
        %v1663 = vadd.f32 %v1597, %v1662
        %1664 = vmatmul.bf16.gmra.mxu0 %v1575
        %v1665 = vpop.f32.mrf.mxu0
        %v1666 = vadd.f32 %v1597, %v1665
        %v1667 = vpop.f32.mrf.mxu0
        %v1668 = vadd.f32 %v1597, %v1667
        %1669 = vmatmul.bf16.gmra.mxu0 %v1576
        %v1670 = vpop.f32.mrf.mxu0
        %v1671 = vadd.f32 %v1597, %v1670
        %v1672 = vpop.f32.mrf.mxu0
        %v1673 = vadd.f32 %v1597, %v1672
        %1674 = vmatmul.bf16.gmra.mxu0 %v1577
        %v1675 = vpop.f32.mrf.mxu0
        %v1676 = vadd.f32 %v1597, %v1675
        %v1677 = vpop.f32.mrf.mxu0
        %v1678 = vadd.f32 %v1597, %v1677
        %1679 = vmatmul.bf16.gmra.mxu0 %v1578
        %v1680 = vpop.f32.mrf.mxu0
        %v1681 = vadd.f32 %v1597, %v1680
        %v1682 = vpop.f32.mrf.mxu0
        %v1683 = vadd.f32 %v1597, %v1682
        %1684 = vmatmul.bf16.gmra.mxu0 %v1579
        %v1685 = vpop.f32.mrf.mxu0
        %v1686 = vadd.f32 %v1597, %v1685
        %v1687 = vpop.f32.mrf.mxu0
        %1688 = vdwg.mxu0
        %v1689 = vmax.f32 %v1656, 0.0
        %v1690 = vmax.f32 %v1658, 0.0
        %v1691 = vmax.f32 %v1661, 0.0
        %v1692 = vmax.f32 %v1663, 0.0
        %v1693 = vmax.f32 %v1666, 0.0
        %v1694 = vmax.f32 %v1668, 0.0
        %v1695 = vmax.f32 %v1671, 0.0
        %v1696 = vmax.f32 %v1673, 0.0
        %v1697 = vmax.f32 %v1676, 0.0
        %v1698 = vmax.f32 %v1678, 0.0
        %v1699 = vmax.f32 %v1681, 0.0
        %v1700 = vmax.f32 %v1683, 0.0
        %v1701 = vmax.f32 %v1686, 0.0
        %v1702 = vpack.c.bf16 %v1690, %v1689
        %v1703 = vpack.c.bf16 %v1692, %v1691
        %v1704 = vpack.c.bf16 %v1694, %v1693
        %v1705 = vpack.c.bf16 %v1696, %v1695
        %v1706 = vpack.c.bf16 %v1698, %v1697
        %v1707 = vpack.c.bf16 %v1700, %v1699
        %v1708 = vpack.c.bf16 %v1701, %v1701
        %s1709 = scalar_lea.vmem [#allocation3], 1792
        %v1710 = vld [vmem:[%s1709] sm:$0xf]
        %v1711 = vld [vmem:[%s1709 + $0x8] sm:$0xf]
        %v1712 = vld [vmem:[%s1709 + $0x10] sm:$0xf]
        %v1713 = vld [vmem:[%s1709 + $0x18] sm:$0xf]
        %v1714 = vld [vmem:[%s1709 + $0x20] sm:$0xf]
        %v1715 = vld [vmem:[%s1709 + $0x28] sm:$0xf]
        %v1716 = vld [vmem:[%s1709 + $0x30] sm:$0xf]
        %v1717 = vld [vmem:[%s1709 + $0x38] sm:$0xf]
        %v1718 = vld [vmem:[%s1709 + $0x40] sm:$0xf]
        %v1719 = vld [vmem:[%s1709 + $0x48] sm:$0xf]
        %v1720 = vld [vmem:[%s1709 + $0x50] sm:$0xf]
        %v1721 = vld [vmem:[%s1709 + $0x58] sm:$0xf]
        %v1722 = vld [vmem:[%s1709 + $0x60] sm:$0xf]
        %v1723 = vld [vmem:[%s1709 + $0x68] sm:$0xf]
        %v1724 = vld [vmem:[%s1709 + $0x70] sm:$0xf]
        %v1725 = vld [vmem:[%s1709 + $0x78] sm:$0xf]
        %v1726 = vld [vmem:[%s2 + $0x7] ss:$0 sm:$0xff]
        %v1743 = vunpack.c.l.b16 %v1710
        %v1744 = vunpack.c.l.b16 %v1711
        %v1745 = vunpack.c.l.b16 %v1712
        %v1746 = vunpack.c.l.b16 %v1713
        %v1747 = vunpack.c.l.b16 %v1714
        %v1748 = vunpack.c.l.b16 %v1715
        %v1749 = vunpack.c.l.b16 %v1716
        %v1750 = vunpack.c.l.b16 %v1717
        %v1751 = vunpack.c.l.b16 %v1718
        %v1752 = vunpack.c.l.b16 %v1719
        %v1753 = vunpack.c.l.b16 %v1720
        %v1754 = vunpack.c.l.b16 %v1721
        %v1755 = vunpack.c.l.b16 %v1722
        %v1756 = vunpack.c.l.b16 %v1723
        %v1757 = vunpack.c.l.b16 %v1724
        %v1758 = vunpack.c.l.b16 %v1725
        %v1759 = vpack.c.b16 %v1744, %v1743
        %v1760 = vpack.c.b16 %v1746, %v1745
        %v1761 = vpack.c.b16 %v1748, %v1747
        %v1762 = vpack.c.b16 %v1750, %v1749
        %v1763 = vpack.c.b16 %v1752, %v1751
        %v1764 = vpack.c.b16 %v1754, %v1753
        %v1765 = vpack.c.b16 %v1756, %v1755
        %v1766 = vpack.c.b16 %v1758, %v1757
        %1775 = vmatpush.bf16.msra.mxu0 %v1766
        %1776 = vmatpush.bf16.msra.mxu0 %v1765
        %1777 = vmatpush.bf16.msra.mxu0 %v1764
        %1778 = vmatpush.bf16.msra.mxu0 %v1763
        %1779 = vmatpush.bf16.msra.mxu0 %v1762
        %1780 = vmatpush.bf16.msra.mxu0 %v1761
        %1781 = vmatpush.bf16.msra.mxu0 %v1760
        %1782 = vmatpush.bf16.msra.mxu0 %v1759
        %1783 = vmatmul.bf16.gmra.mxu0 %v1702
        %v1784 = vpop.f32.mrf.mxu0
        %v1785 = vadd.f32 %v1726, %v1784
        %v1786 = vpop.f32.mrf.mxu0
        %v1787 = vadd.f32 %v1726, %v1786
        %1788 = vmatmul.bf16.gmra.mxu0 %v1703
        %v1789 = vpop.f32.mrf.mxu0
        %v1790 = vadd.f32 %v1726, %v1789
        %v1791 = vpop.f32.mrf.mxu0
        %v1792 = vadd.f32 %v1726, %v1791
        %1793 = vmatmul.bf16.gmra.mxu0 %v1704
        %v1794 = vpop.f32.mrf.mxu0
        %v1795 = vadd.f32 %v1726, %v1794
        %v1796 = vpop.f32.mrf.mxu0
        %v1797 = vadd.f32 %v1726, %v1796
        %1798 = vmatmul.bf16.gmra.mxu0 %v1705
        %v1799 = vpop.f32.mrf.mxu0
        %v1800 = vadd.f32 %v1726, %v1799
        %v1801 = vpop.f32.mrf.mxu0
        %v1802 = vadd.f32 %v1726, %v1801
        %1803 = vmatmul.bf16.gmra.mxu0 %v1706
        %v1804 = vpop.f32.mrf.mxu0
        %v1805 = vadd.f32 %v1726, %v1804
        %v1806 = vpop.f32.mrf.mxu0
        %v1807 = vadd.f32 %v1726, %v1806
        %1808 = vmatmul.bf16.gmra.mxu0 %v1707
        %v1809 = vpop.f32.mrf.mxu0
        %v1810 = vadd.f32 %v1726, %v1809
        %v1811 = vpop.f32.mrf.mxu0
        %v1812 = vadd.f32 %v1726, %v1811
        %1813 = vmatmul.bf16.gmra.mxu0 %v1708
        %v1814 = vpop.f32.mrf.mxu0
        %v1815 = vadd.f32 %v1726, %v1814
        %v1816 = vpop.f32.mrf.mxu0
        %1817 = vdwg.mxu0
        %1818 = vst [vmem:[%s189] sm:$0xff] %v1785
        %1819 = vst [vmem:[%s189 + $0x8] sm:$0xff] %v1787
        %1820 = vst [vmem:[%s189 + $0x10] sm:$0xff] %v1790
        %1821 = vst [vmem:[%s189 + $0x18] sm:$0xff] %v1792
        %1822 = vst [vmem:[%s189 + $0x20] sm:$0xff] %v1795
        %1823 = vst [vmem:[%s189 + $0x28] sm:$0xff] %v1797
        %1824 = vst [vmem:[%s189 + $0x30] sm:$0xff] %v1800
        %1825 = vst [vmem:[%s189 + $0x38] sm:$0xff] %v1802
        %1826 = vst [vmem:[%s189 + $0x40] sm:$0xff] %v1805
        %1827 = vst [vmem:[%s189 + $0x48] sm:$0xff] %v1807
        %1828 = vst [vmem:[%s189 + $0x50] sm:$0xff] %v1810
        %1829 = vst [vmem:[%s189 + $0x58] sm:$0xff] %v1812
        %1830 = vst [vmem:[%s189 + $0x60] sm:$0xff] %v1815
        %s1831 = sand.u32 %s91, 1
        %s1832 = sand.u32 %s91, 1
        %s1833 = smul.addr %s1832, 104
        %s1834 = scalar_lea.vmem [#allocation5], %s1833
        // Predicated region
        $region37: #{meta_classifier_forward.1} parent=31 // pred_check
          %p1835 = pneg %p101
        $region38: #{meta_classifier_forward.1} parent=31 // pred_check_branch
          %1837 = sbr.rel (%p1835) target = $region40
        $region39: #{meta_classifier_forward.1} parent=31 // pred_region
          %s1838 = smul.u32 13, %s15
          %s1839 = ssub.s32 25, %s1838
          %p1840 = scmp.lt.s32.totalorder %s1839, 13
          %s1841 = scalar_select %p1840, %s1839, 13
          %s1842 = smul.u32 8, %s1841
          %p1843 = scmp.ne.s32.totalorder 0, %s1842
          %s1844 = smul.addr %s1838, 8
          %s1845 = scalar_lea.vmem %s3, %s1844
          // Predicated region
          $region41: #{meta_classifier_forward.1} parent=39 // pred_check
            %p1846 = pneg %p1843
          $region42: #{meta_classifier_forward.1} parent=39 // pred_check_branch
            %1848 = sbr.rel (%p1846) target = $region44
          $region43: #{meta_classifier_forward.1} parent=39 // pred_region
            // Predicated region
            $region45: #{meta_classifier_forward.1} parent=43 // pred_check
              _
            $region46: #{meta_classifier_forward.1} parent=43 // pred_check_branch
              %1850 = sbr.rel (0) target = $region48
            $region47: #{meta_classifier_forward.1} parent=43 // pred_region
              // Predicated region
              $region67: #{meta_classifier_forward.1} parent=47 // pred_check
                _
              $region68: #{meta_classifier_forward.1} parent=47 // pred_check_branch
                %1925 = sbr.rel (0) target = $region70
              $region69: #{meta_classifier_forward.1} parent=47 // pred_region
                %s1926 = sdiv.u32.pop %s1841, 13
                %s1927 = srem.u32.pop %s1841, 13
                // While loop
                $region71: #{meta_classifier_forward.1} parent=69 // loop_pre_header
                  _
                $region72: #{meta_classifier_forward.1} parent=69 // loop_header
                  %s1929 = sphi 0, %s1931
                  %p1930 = scmp.ge.s32.totalorder %s1929, %s1926
                  %s1934 = sphi 0, %s1965
                  %s1935 = sphi %s1834, %s1968
                  %s1936 = sphi %s1845, %s1969
                $region73: #{meta_classifier_forward.1} parent=69 // loop_header_branch
                  %1933 = sbr.rel (%p1930) target = $region77
                $region74: #{meta_classifier_forward.1} parent=69 // loop_body
                  %v1937 = vld [vmem:[%s1935] sm:$0xff]
                  %1938 = vst [vmem:[%s1936] sm:$0xff] %v1937
                  %v1939 = vld [vmem:[%s1935 + $0x8] sm:$0xff]
                  %1940 = vst [vmem:[%s1936 + $0x8] sm:$0xff] %v1939
                  %v1941 = vld [vmem:[%s1935 + $0x10] sm:$0xff]
                  %1942 = vst [vmem:[%s1936 + $0x10] sm:$0xff] %v1941
                  %v1943 = vld [vmem:[%s1935 + $0x18] sm:$0xff]
                  %1944 = vst [vmem:[%s1936 + $0x18] sm:$0xff] %v1943
                  %v1945 = vld [vmem:[%s1935 + $0x20] sm:$0xff]
                  %1946 = vst [vmem:[%s1936 + $0x20] sm:$0xff] %v1945
                  %v1947 = vld [vmem:[%s1935 + $0x28] sm:$0xff]
                  %1948 = vst [vmem:[%s1936 + $0x28] sm:$0xff] %v1947
                  %v1949 = vld [vmem:[%s1935 + $0x30] sm:$0xff]
                  %1950 = vst [vmem:[%s1936 + $0x30] sm:$0xff] %v1949
                  %v1951 = vld [vmem:[%s1935 + $0x38] sm:$0xff]
                  %1952 = vst [vmem:[%s1936 + $0x38] sm:$0xff] %v1951
                  %v1953 = vld [vmem:[%s1935 + $0x40] sm:$0xff]
                  %1954 = vst [vmem:[%s1936 + $0x40] sm:$0xff] %v1953
                  %v1955 = vld [vmem:[%s1935 + $0x48] sm:$0xff]
                  %1956 = vst [vmem:[%s1936 + $0x48] sm:$0xff] %v1955
                  %v1957 = vld [vmem:[%s1935 + $0x50] sm:$0xff]
                  %1958 = vst [vmem:[%s1936 + $0x50] sm:$0xff] %v1957
                  %v1959 = vld [vmem:[%s1935 + $0x58] sm:$0xff]
                  %1960 = vst [vmem:[%s1936 + $0x58] sm:$0xff] %v1959
                  %v1961 = vld [vmem:[%s1935 + $0x60] sm:$0xff]
                  %1962 = vst [vmem:[%s1936 + $0x60] sm:$0xff] %v1961
                  %s1963 = sadd.s32 1, %s1934
                  %p1964 = scmp.ge.s32.totalorder %s1963, %s1926
                  %s1965 = scalar_select %p1964, 0, %s1963
                  %s1966 = smul.u32 %s1965, 104
                  %s1967 = smul.u32 %s1965, 104
                  %s1968 = scalar_lea.vmem %s1834, %s1966 [#allocation5]
                  %s1969 = scalar_lea.vmem %s1845, %s1967
                $region75: #{meta_classifier_forward.1} parent=69 // loop_footer
                  %s1931 = sadd.s32 %s1929, 1
                $region76: #{meta_classifier_forward.1} parent=69 // loop_footer_branch
                  %1928 = sbr.rel target = $region72
                $region77: #{meta_classifier_forward.1} parent=69 // loop_exit
                  _
                %s1970 = sdiv.u32.pop %s1841, 13
                %s1971 = srem.u32.pop %s1841, 13
                %s1972 = smul.u32 %s1970, 13
                %s1973 = smul.u32 8, %s1972
                %s1974 = scalar_lea.vmem %s1834, %s1973 [#allocation5]
                %s1975 = smul.u32 8, %s1972
                %s1976 = scalar_lea.vmem %s1845, %s1975
                // While loop
                $region78: #{meta_classifier_forward.1} parent=69 // loop_pre_header
                  _
                $region79: #{meta_classifier_forward.1} parent=69 // loop_header
                  %s1978 = sphi 0, %s1980
                  %p1979 = scmp.ge.s32.totalorder %s1978, %s1971
                  %s1983 = sphi 0, %s1990
                  %s1984 = sphi %s1974, %s1993
                  %s1985 = sphi %s1976, %s1994
                $region80: #{meta_classifier_forward.1} parent=69 // loop_header_branch
                  %1982 = sbr.rel (%p1979) target = $region84
                $region81: #{meta_classifier_forward.1} parent=69 // loop_body
                  %v1986 = vld [vmem:[%s1984] sm:$0xff]
                  %1987 = vst [vmem:[%s1985] sm:$0xff] %v1986
                  %s1988 = sadd.s32 1, %s1983
                  %p1989 = scmp.ge.s32.totalorder %s1988, %s1971
                  %s1990 = scalar_select %p1989, 0, %s1988
                  %s1991 = smul.u32 %s1990, 8
                  %s1992 = smul.u32 %s1990, 8
                  %s1993 = scalar_lea.vmem %s1974, %s1991 [#allocation5]
                  %s1994 = scalar_lea.vmem %s1976, %s1992
                $region82: #{meta_classifier_forward.1} parent=69 // loop_footer
                  %s1980 = sadd.s32 %s1978, 1
                $region83: #{meta_classifier_forward.1} parent=69 // loop_footer_branch
                  %1977 = sbr.rel target = $region79
                $region84: #{meta_classifier_forward.1} parent=69 // loop_exit
                  _
              $region70: #{meta_classifier_forward.1} parent=47 // pred_fallthru
                _
              // Predicated region
              $region85: #{meta_classifier_forward.1} parent=47 // pred_check
                _
              $region86: #{meta_classifier_forward.1} parent=47 // pred_check_branch
                %1996 = sbr.rel target = $region88
              $region87: #{meta_classifier_forward.1} parent=47 // pred_region
                _
              $region88: #{meta_classifier_forward.1} parent=47 // pred_fallthru
                _
            $region48: #{meta_classifier_forward.1} parent=43 // pred_fallthru
              _
            // Predicated region
            $region49: #{meta_classifier_forward.1} parent=43 // pred_check
              _
            $region50: #{meta_classifier_forward.1} parent=43 // pred_check_branch
              %1852 = sbr.rel target = $region52
            $region51: #{meta_classifier_forward.1} parent=43 // pred_region
              %s1854 = ssub.s32 256, 1
              %s1855 = sdiv.u32.pop %s1841, 13
              %s1856 = srem.u32.pop %s1841, 13
              // While loop
              $region53: #{meta_classifier_forward.1} parent=51 // loop_pre_header
                _
              $region54: #{meta_classifier_forward.1} parent=51 // loop_header
                %s1858 = sphi 0, %s1860
                %p1859 = scmp.ge.s32.totalorder %s1858, %s1855
                %s1863 = sphi 0, %s1894
                %s1864 = sphi %s1834, %s1897
                %s1865 = sphi %s1845, %s1898
              $region55: #{meta_classifier_forward.1} parent=51 // loop_header_branch
                %1862 = sbr.rel (%p1859) target = $region59
              $region56: #{meta_classifier_forward.1} parent=51 // loop_body
                %v1866 = vld [vmem:[%s1864] sm:%s1854]
                %1867 = vst [vmem:[%s1865] sm:%s1854] %v1866
                %v1868 = vld [vmem:[%s1864 + $0x8] sm:%s1854]
                %1869 = vst [vmem:[%s1865 + $0x8] sm:%s1854] %v1868
                %v1870 = vld [vmem:[%s1864 + $0x10] sm:%s1854]
                %1871 = vst [vmem:[%s1865 + $0x10] sm:%s1854] %v1870
                %v1872 = vld [vmem:[%s1864 + $0x18] sm:%s1854]
                %1873 = vst [vmem:[%s1865 + $0x18] sm:%s1854] %v1872
                %v1874 = vld [vmem:[%s1864 + $0x20] sm:%s1854]
                %1875 = vst [vmem:[%s1865 + $0x20] sm:%s1854] %v1874
                %v1876 = vld [vmem:[%s1864 + $0x28] sm:%s1854]
                %1877 = vst [vmem:[%s1865 + $0x28] sm:%s1854] %v1876
                %v1878 = vld [vmem:[%s1864 + $0x30] sm:%s1854]
                %1879 = vst [vmem:[%s1865 + $0x30] sm:%s1854] %v1878
                %v1880 = vld [vmem:[%s1864 + $0x38] sm:%s1854]
                %1881 = vst [vmem:[%s1865 + $0x38] sm:%s1854] %v1880
                %v1882 = vld [vmem:[%s1864 + $0x40] sm:%s1854]
                %1883 = vst [vmem:[%s1865 + $0x40] sm:%s1854] %v1882
                %v1884 = vld [vmem:[%s1864 + $0x48] sm:%s1854]
                %1885 = vst [vmem:[%s1865 + $0x48] sm:%s1854] %v1884
                %v1886 = vld [vmem:[%s1864 + $0x50] sm:%s1854]
                %1887 = vst [vmem:[%s1865 + $0x50] sm:%s1854] %v1886
                %v1888 = vld [vmem:[%s1864 + $0x58] sm:%s1854]
                %1889 = vst [vmem:[%s1865 + $0x58] sm:%s1854] %v1888
                %v1890 = vld [vmem:[%s1864 + $0x60] sm:%s1854]
                %1891 = vst [vmem:[%s1865 + $0x60] sm:%s1854] %v1890
                %s1892 = sadd.s32 1, %s1863
                %p1893 = scmp.ge.s32.totalorder %s1892, %s1855
                %s1894 = scalar_select %p1893, 0, %s1892
                %s1895 = smul.u32 %s1894, 104
                %s1896 = smul.u32 %s1894, 104
                %s1897 = scalar_lea.vmem %s1834, %s1895 [#allocation5]
                %s1898 = scalar_lea.vmem %s1845, %s1896
              $region57: #{meta_classifier_forward.1} parent=51 // loop_footer
                %s1860 = sadd.s32 %s1858, 1
              $region58: #{meta_classifier_forward.1} parent=51 // loop_footer_branch
                %1857 = sbr.rel target = $region54
              $region59: #{meta_classifier_forward.1} parent=51 // loop_exit
                _
              %s1899 = sdiv.u32.pop %s1841, 13
              %s1900 = srem.u32.pop %s1841, 13
              %s1901 = smul.u32 %s1899, 13
              %s1902 = smul.u32 8, %s1901
              %s1903 = scalar_lea.vmem %s1834, %s1902 [#allocation5]
              %s1904 = smul.u32 8, %s1901
              %s1905 = scalar_lea.vmem %s1845, %s1904
              // While loop
              $region60: #{meta_classifier_forward.1} parent=51 // loop_pre_header
                _
              $region61: #{meta_classifier_forward.1} parent=51 // loop_header
                %s1907 = sphi 0, %s1909
                %p1908 = scmp.ge.s32.totalorder %s1907, %s1900
                %s1912 = sphi 0, %s1919
                %s1913 = sphi %s1903, %s1922
                %s1914 = sphi %s1905, %s1923
              $region62: #{meta_classifier_forward.1} parent=51 // loop_header_branch
                %1911 = sbr.rel (%p1908) target = $region66
              $region63: #{meta_classifier_forward.1} parent=51 // loop_body
                %v1915 = vld [vmem:[%s1913] sm:%s1854]
                %1916 = vst [vmem:[%s1914] sm:%s1854] %v1915
                %s1917 = sadd.s32 1, %s1912
                %p1918 = scmp.ge.s32.totalorder %s1917, %s1900
                %s1919 = scalar_select %p1918, 0, %s1917
                %s1920 = smul.u32 %s1919, 8
                %s1921 = smul.u32 %s1919, 8
                %s1922 = scalar_lea.vmem %s1903, %s1920 [#allocation5]
                %s1923 = scalar_lea.vmem %s1905, %s1921
              $region64: #{meta_classifier_forward.1} parent=51 // loop_footer
                %s1909 = sadd.s32 %s1907, 1
              $region65: #{meta_classifier_forward.1} parent=51 // loop_footer_branch
                %1906 = sbr.rel target = $region61
              $region66: #{meta_classifier_forward.1} parent=51 // loop_exit
                _
            $region52: #{meta_classifier_forward.1} parent=43 // pred_fallthru
              _
          $region44: #{meta_classifier_forward.1} parent=39 // pred_fallthru
            _
          %1997 = vnop
        $region40: #{meta_classifier_forward.1} parent=31 // pred_fallthru
          _
      $region32: #{meta_classifier_forward.1} parent=5 // pred_fallthru
        _
      %p1998 = scmp.le.s32.totalorder 2, %s10
      // Predicated region
      $region89: #{meta_classifier_forward.1} parent=5 // pred_check
        %p1999 = pneg %p1998
      $region90: #{meta_classifier_forward.1} parent=5 // pred_check_branch
        %2001 = sbr.rel (%p1999) target = $region92
      $region91: #{meta_classifier_forward.1} parent=5 // pred_region
        %s2002 = ssub.s32 %s10, 2
        // Predicated region
        $region93: #{meta_classifier_forward.1} parent=91 // pred_check
          %p2003 = pneg %p107
        $region94: #{meta_classifier_forward.1} parent=91 // pred_check_branch
          %2005 = sbr.rel (%p2003) target = $region96
        $region95: #{meta_classifier_forward.1} parent=91 // pred_region
          %s2006 = sand.u32 %s92, 1
          %s2007 = sand.u32 %s92, 1
          %s2008 = smul.addr %s2007, 104
          %s2009 = scalar_lea.vmem [#allocation5], %s2008
        $region96: #{meta_classifier_forward.1} parent=91 // pred_fallthru
          _
      $region92: #{meta_classifier_forward.1} parent=5 // pred_fallthru
        _
    $region6: #{meta_classifier_forward.1} parent=1 // loop_footer
      %s14 = sadd.s32 1, %s10
    $region7: #{meta_classifier_forward.1} parent=1 // loop_footer_branch
      %9 = sbr.rel target = $region3
    $region8: #{meta_classifier_forward.1} parent=1 // loop_exit
      _
    %2010 = vsyncpa [#allocation4], 1
    %s2011 = scalar_lea.sflag [#allocation4], 1
    %2012 = vsyncpa %s2011, 1

</llo_original>
